<compile_context>
chip_gen: v7x
topology: tpu7x:2x2x1
jax: 0.10.0
libtpu: 0.0.40
codegen_flags: <defaults>
</compile_context>

<pallas_src>
import functools
import math

import jax
import jax.numpy as jnp
from jax.experimental import pallas as pl
from jax.experimental.pallas import tpu as pltpu


# ----------------------------------------------------------------------------
# tiling helper: largest tile <= target that is a multiple of `align` and
# divides `dim`; falls back to the full dimension (always legal for BlockSpec).
# ----------------------------------------------------------------------------
def _tile(dim, target, align):
    if dim <= target:
        return dim
    t = (target // align) * align
    while t >= align:
        if dim % t == 0:
            return t
        t -= align
    return dim


# ----------------------------------------------------------------------------
# Kernels
# ----------------------------------------------------------------------------
def _linear_kernel(x_ref, w_ref, b_ref, o_ref, acc_ref, *, activation):
    # x: (tm, tk) f32, w: (tk, tn) bf16 (pre-transposed), b: (1, tn) f32
    kk = pl.program_id(2)

    @pl.when(kk == 0)
    def _():
        acc_ref[...] = jnp.zeros_like(acc_ref)

    acc_ref[...] += jnp.dot(
        x_ref[...].astype(jnp.bfloat16), w_ref[...],
        preferred_element_type=jnp.float32)

    @pl.when(kk == pl.num_programs(2) - 1)
    def _():
        y = acc_ref[...] + b_ref[...]
        if activation == "relu":
            y = jnp.maximum(y, 0.0)
        o_ref[...] = y


def _linear_addln_kernel(x_ref, w_ref, b_ref, r_ref, g_ref, bt_ref,
                         o_ref, acc_ref):
    # fused: LayerNorm(residual + (x @ w + b)) -- post-norm, eps = 1e-5
    kk = pl.program_id(1)

    @pl.when(kk == 0)
    def _():
        acc_ref[...] = jnp.zeros_like(acc_ref)

    acc_ref[...] += jnp.dot(
        x_ref[...].astype(jnp.bfloat16), w_ref[...],
        preferred_element_type=jnp.float32)

    @pl.when(kk == pl.num_programs(1) - 1)
    def _():
        y = acc_ref[...] + b_ref[...] + r_ref[...]
        mean = jnp.mean(y, axis=-1, keepdims=True)
        var = jnp.mean(jnp.square(y - mean), axis=-1, keepdims=True)
        yn = (y - mean) * jax.lax.rsqrt(var + 1e-5)
        o_ref[...] = yn * g_ref[...] + bt_ref[...]


def _ffn_addln_kernel(x_ref, w1_ref, b1_ref, w2_ref, b2_ref, r_ref,
                      g_ref, bt_ref, o_ref):
    # fused feed-forward block:
    #   LayerNorm(residual + relu(x @ w1 + b1) @ w2 + b2), eps = 1e-5
    # Both weight matrices are resident in VMEM; the (tm, dim_ff)
    # intermediate never touches HBM.
    x = x_ref[...].astype(jnp.bfloat16)
    f = jnp.dot(x, w1_ref[...], preferred_element_type=jnp.float32)
    f = jnp.maximum(f + b1_ref[...], 0.0)
    y = jnp.dot(f.astype(jnp.bfloat16), w2_ref[...],
                preferred_element_type=jnp.float32)
    y = y + b2_ref[...] + r_ref[...]
    mean = jnp.mean(y, axis=-1, keepdims=True)
    var = jnp.mean(jnp.square(y - mean), axis=-1, keepdims=True)
    yn = (y - mean) * jax.lax.rsqrt(var + 1e-5)
    o_ref[...] = yn * g_ref[...] + bt_ref[...]


def _mha_kernel(qkv_q_ref, qkv_kv_ref, o_ref, *, nhead, hidden, scale):
    # qkv_q: (1, tq, 3H) query rows, qkv_kv: (1, S, 3H) full keys/values.
    # Heads and the q/k/v split are sliced in-kernel -> no host transposes.
    # TODO(synk): flash-style KV tiling (online softmax) for long sequences;
    #             here the full (tq, S) score block is materialized.
    qkv_q = qkv_q_ref[0]
    qkv_kv = qkv_kv_ref[0]
    dh = hidden // nhead
    outs = []
    for h in range(nhead):
        q_h = qkv_q[:, h * dh:(h + 1) * dh].astype(jnp.bfloat16)
        k_h = qkv_kv[:, hidden + h * dh:hidden + (h + 1) * dh].astype(jnp.bfloat16)
        v_h = qkv_kv[:, 2 * hidden + h * dh:2 * hidden + (h + 1) * dh].astype(jnp.bfloat16)
        # q @ k^T without materializing a transpose (contract on last dims)
        s = jax.lax.dot_general(
            q_h, k_h, (((1,), (1,)), ((), ())),
            preferred_element_type=jnp.float32) * scale
        s = s - jnp.max(s, axis=-1, keepdims=True)
        p = jnp.exp(s)
        p = p * pl.reciprocal(jnp.sum(p, axis=-1, keepdims=True), approx=True)
        outs.append(jnp.dot(p.astype(jnp.bfloat16), v_h,
                            preferred_element_type=jnp.float32))
    o_ref[0] = jnp.concatenate(outs, axis=-1)


# ----------------------------------------------------------------------------
# pallas_call wrappers
# ----------------------------------------------------------------------------
def pallas_linear(x, w_t, b, activation=None):
    # x: (M, K) f32, w_t: (K, N) bf16, b: (N,) f32
    M, K = x.shape
    N = w_t.shape[1]
    tm = _tile(M, 256, 8)
    tn = _tile(N, 256, 128)
    tk = _tile(K, 512, 128)
    kern = functools.partial(_linear_kernel, activation=activation)
    return pl.pallas_call(
        kern,
        out_shape=jax.ShapeDtypeStruct((M, N), jnp.float32),
        grid=(M // tm, N // tn, K // tk),
        in_specs=[
            pl.BlockSpec((tm, tk), lambda i, j, kk: (i, kk)),
            pl.BlockSpec((tk, tn), lambda i, j, kk: (kk, j)),
            pl.BlockSpec((1, tn), lambda i, j, kk: (0, j)),
        ],
        out_specs=pl.BlockSpec((tm, tn), lambda i, j, kk: (i, j)),
        scratch_shapes=[pltpu.VMEM((tm, tn), jnp.float32)],
        compiler_params=pltpu.CompilerParams(
            dimension_semantics=("parallel", "parallel", "arbitrary")),
    )(x, w_t, b.reshape(1, N))


def pallas_linear_add_layernorm(x, w_t, b, res, gamma, beta):
    # LayerNorm(res + x @ w_t + b); N kept whole (LN reduces over it).
    M, K = x.shape
    N = w_t.shape[1]
    tm = _tile(M, 256, 8)
    tk = _tile(K, 512, 128)
    return pl.pallas_call(
        _linear_addln_kernel,
        out_shape=jax.ShapeDtypeStruct((M, N), jnp.float32),
        grid=(M // tm, K // tk),
        in_specs=[
            pl.BlockSpec((tm, tk), lambda i, kk: (i, kk)),
            pl.BlockSpec((tk, N), lambda i, kk: (kk, 0)),
            pl.BlockSpec((1, N), lambda i, kk: (0, 0)),
            pl.BlockSpec((tm, N), lambda i, kk: (i, 0)),
            pl.BlockSpec((1, N), lambda i, kk: (0, 0)),
            pl.BlockSpec((1, N), lambda i, kk: (0, 0)),
        ],
        out_specs=pl.BlockSpec((tm, N), lambda i, kk: (i, 0)),
        scratch_shapes=[pltpu.VMEM((tm, N), jnp.float32)],
        compiler_params=pltpu.CompilerParams(
            dimension_semantics=("parallel", "arbitrary")),
    )(x, w_t, b.reshape(1, N), res, gamma.reshape(1, N), beta.reshape(1, N))


# Both FFN weights (H x F and F x H, bf16) must fit in VMEM with headroom for
# the fused single-kernel FFN; otherwise fall back to two kernels.
_FFN_FUSE_VMEM_BUDGET = 24 * 1024 * 1024


def pallas_ffn_add_layernorm(x, w1_t, b1, w2_t, b2, res, gamma, beta):
    # LayerNorm(res + relu(x @ w1 + b1) @ w2 + b2)
    M, H = x.shape
    F = w1_t.shape[1]
    weight_bytes = 2 * (H * F + F * H)
    if weight_bytes > _FFN_FUSE_VMEM_BUDGET:
        # fall back: unfused lin1, then lin2 fused with residual + LN
        f = pallas_linear(x, w1_t, b1, activation="relu")
        return pallas_linear_add_layernorm(f, w2_t, b2, res, gamma, beta)

    tm = _tile(M, 256, 8)
    return pl.pallas_call(
        _ffn_addln_kernel,
        out_shape=jax.ShapeDtypeStruct((M, H), jnp.float32),
        grid=(M // tm,),
        in_specs=[
            pl.BlockSpec((tm, H), lambda i: (i, 0)),
            pl.BlockSpec((H, F), lambda i: (0, 0)),
            pl.BlockSpec((1, F), lambda i: (0, 0)),
            pl.BlockSpec((F, H), lambda i: (0, 0)),
            pl.BlockSpec((1, H), lambda i: (0, 0)),
            pl.BlockSpec((tm, H), lambda i: (i, 0)),
            pl.BlockSpec((1, H), lambda i: (0, 0)),
            pl.BlockSpec((1, H), lambda i: (0, 0)),
        ],
        out_specs=pl.BlockSpec((tm, H), lambda i: (i, 0)),
        compiler_params=pltpu.CompilerParams(
            dimension_semantics=("parallel",)),
    )(x, w1_t, b1.reshape(1, F), w2_t, b2.reshape(1, H),
      res, gamma.reshape(1, H), beta.reshape(1, H))


def pallas_mha(qkv, *, nhead, hidden, scale):
    # qkv: (B, S, 3H) fused projection output
    B, S, threeH = qkv.shape
    tq = _tile(S, 512, 8)
    kern = functools.partial(_mha_kernel, nhead=nhead, hidden=hidden, scale=scale)
    q_spec = pl.BlockSpec((1, tq, threeH), lambda b, qi: (b, qi, 0))
    kv_spec = pl.BlockSpec((1, S, threeH), lambda b, qi: (b, 0, 0))
    return pl.pallas_call(
        kern,
        out_shape=jax.ShapeDtypeStruct((B, S, hidden), jnp.float32),
        grid=(B, S // tq),
        in_specs=[q_spec, kv_spec],
        out_specs=pl.BlockSpec((1, tq, hidden), lambda b, qi: (b, qi, 0)),
        compiler_params=pltpu.CompilerParams(
            dimension_semantics=("parallel", "parallel")),
    )(qkv, qkv)


# ----------------------------------------------------------------------------
# Parameter init (deterministic, synthetic).  Weights are stored directly in
# the kernel-ready layout: pre-transposed (in_features, out_features), bf16.
# ----------------------------------------------------------------------------
def init_params(key, input_size, hidden, output, num_layers):
    def dense(k, shape, scale=0.02):
        return scale * jax.random.normal(k, shape, dtype=jnp.float32)

    def w(k, shape):
        return dense(k, shape).astype(jnp.bfloat16)

    keys = iter(jax.random.split(key, 4 + 8 * num_layers))
    params = {
        "emb_w_t": w(next(keys), (input_size, hidden)),
        "emb_b": dense(next(keys), (hidden,)),
        "fc_w_t": w(next(keys), (hidden, output)),
        "fc_b": dense(next(keys), (output,)),
        "layers": [],
    }
    for _ in range(num_layers):
        lyr = {
            # fused QKV: columns [0:H]=q, [H:2H]=k, [2H:3H]=v (PyTorch order)
            "in_proj_w_t": w(next(keys), (hidden, 3 * hidden)),
            "in_proj_b": dense(next(keys), (3 * hidden,)),
            "out_w_t": w(next(keys), (hidden, hidden)),
            "out_b": dense(next(keys), (hidden,)),
            # dim_feedforward == hidden_size in the PyTorch module
            "lin1_w_t": w(next(keys), (hidden, hidden)),
            "lin1_b": dense(next(keys), (hidden,)),
            "lin2_w_t": w(next(keys), (hidden, hidden)),
            "lin2_b": dense(next(keys), (hidden,)),
            "ln1_g": jnp.ones((hidden,), jnp.float32),
            "ln1_b": jnp.zeros((hidden,), jnp.float32),
            "ln2_g": jnp.ones((hidden,), jnp.float32),
            "ln2_b": jnp.zeros((hidden,), jnp.float32),
        }
        params["layers"].append(lyr)
    return params


# ----------------------------------------------------------------------------
# Forward pass (glue in plain JAX, compute in Pallas kernels)
# ----------------------------------------------------------------------------
def transformer_forward(x, params, *, nhead):
    S, B, E = x.shape
    H = params["emb_b"].shape[0]
    scale = 1.0 / math.sqrt(H // nhead)

    # seq-first -> batch-first once (so attention needs no per-layer transposes)
    h = pallas_linear(jnp.transpose(x, (1, 0, 2)).reshape(B * S, E),
                      params["emb_w_t"], params["emb_b"])

    for lyr in params["layers"]:
        # --- multi-head self-attention (post-norm) ---
        qkv = pallas_linear(h, lyr["in_proj_w_t"], lyr["in_proj_b"])   # (B*S, 3H)
        attn = pallas_mha(qkv.reshape(B, S, 3 * H),
                          nhead=nhead, hidden=H, scale=scale).reshape(B * S, H)
        h = pallas_linear_add_layernorm(attn, lyr["out_w_t"], lyr["out_b"],
                                        h, lyr["ln1_g"], lyr["ln1_b"])

        # --- feed-forward (ReLU) fused with residual-add + LayerNorm ---
        h = pallas_ffn_add_layernorm(h, lyr["lin1_w_t"], lyr["lin1_b"],
                                     lyr["lin2_w_t"], lyr["lin2_b"],
                                     h, lyr["ln2_g"], lyr["ln2_b"])

    # final projection, then back to seq-first layout
    out = pallas_linear(h, params["fc_w_t"], params["fc_b"])
    return jnp.transpose(out.reshape(B, S, -1), (1, 0, 2))


if __name__ == "__main__":
    # Small shapes consistent with the module's forward
    input_size, hidden_size, output_size = 16, 32, 8
    num_layers, nhead = 2, 4
    seq, batch = 8, 2

    key = jax.random.PRNGKey(0)
    k_x, k_p = jax.random.split(key)
    x = jax.random.normal(k_x, (seq, batch, input_size), dtype=jnp.float32)
    params = init_params(k_p, input_size, hidden_size, output_size, num_layers)

    fwd = jax.jit(functools.partial(transformer_forward, nhead=nhead))
    y = fwd(x, params)
    jax.block_until_ready(y)
    assert y.shape == (seq, batch, output_size)
    print("KERNEL_OK")
</pallas_src>

<mosaic_0001>
module attributes {stable_mosaic.version = 11 : i64} {
  func.func @_linear_kernel(%arg0: i32, %arg1: i32, %arg2: i32, %arg3: memref<16x32xf32, #tpu.memory_space<vmem>>, %arg4: memref<32x96xbf16, #tpu.memory_space<vmem>>, %arg5: memref<1x96xf32, #tpu.memory_space<vmem>>, %arg6: memref<16x96xf32, #tpu.memory_space<vmem>>, %arg7: memref<16x96xf32, #tpu.memory_space<vmem>>) attributes {dimension_semantics = [#tpu.dimension_semantics<parallel>, #tpu.dimension_semantics<parallel>, #tpu.dimension_semantics<arbitrary>], iteration_bounds = array<i64: 1, 1, 1>, scalar_prefetch = 0 : i64, scratch_operands = 1 : i64, tpu.core_type = #tpu.core_type<tc>, window_params = [{transform_indices = @transform_0, window_bounds = array<i64: 16, 32>}, {transform_indices = @transform_1, window_bounds = array<i64: 32, 96>}, {transform_indices = @transform_2, window_bounds = array<i64: 1, 96>}, {transform_indices = @transform_3, window_bounds = array<i64: 16, 96>}]} {
    %c0_i32 = arith.constant 0 : i32
    %0 = arith.cmpi eq, %arg2, %c0_i32 : i32
    %1 = arith.extui %0 : i1 to i32
    %c0_i32_0 = arith.constant 0 : i32
    %2 = arith.cmpi ne, %1, %c0_i32_0 : i32
    scf.if %2 {
      %cst_10 = arith.constant 0.000000e+00 : f32
      %13 = vector.broadcast %cst_10 : f32 to vector<16x96xf32>
      %c0_11 = arith.constant 0 : index
      %c0_12 = arith.constant 0 : index
      %14 = vector.load %arg7[%c0_11, %c0_12] : memref<16x96xf32, #tpu.memory_space<vmem>>, vector<16x96xf32>
      tpu.vector_store %arg7[%c0_11, %c0_12], %13 {strides = array<i32>} : memref<16x96xf32, #tpu.memory_space<vmem>>, vector<16x96xf32>,
    } else {
    }
    %c0 = arith.constant 0 : index
    %c0_1 = arith.constant 0 : index
    %3 = vector.load %arg7[%c0, %c0_1] : memref<16x96xf32, #tpu.memory_space<vmem>>, vector<16x96xf32>
    %c0_2 = arith.constant 0 : index
    %c0_3 = arith.constant 0 : index
    %4 = vector.load %arg3[%c0_2, %c0_3] : memref<16x32xf32, #tpu.memory_space<vmem>>, vector<16x32xf32>
    %5 = arith.truncf %4 : vector<16x32xf32> to vector<16x32xbf16>
    %c0_4 = arith.constant 0 : index
    %c0_5 = arith.constant 0 : index
    %6 = vector.load %arg4[%c0_4, %c0_5] : memref<32x96xbf16, #tpu.memory_space<vmem>>, vector<32x96xbf16>
    %cst = arith.constant dense<0.000000e+00> : vector<16x96xf32>
    %7 = tpu.matmul %5, %6, %cst {dimension_numbers = #tpu.dot_dimension_numbers<[1], [0], [0], [1], [0, 0, 1, 1], [], []>} : vector<16x32xbf16>, vector<32x96xbf16>, vector<16x96xf32> -> vector<16x96xf32>
    %8 = arith.addf %3, %7 : vector<16x96xf32>
    %c0_6 = arith.constant 0 : index
    %c0_7 = arith.constant 0 : index
    %9 = vector.load %arg7[%c0_6, %c0_7] : memref<16x96xf32, #tpu.memory_space<vmem>>, vector<16x96xf32>
    tpu.vector_store %arg7[%c0_6, %c0_7], %8 {strides = array<i32>} : memref<16x96xf32, #tpu.memory_space<vmem>>, vector<16x96xf32>,
    %c0_i32_8 = arith.constant 0 : i32
    %10 = arith.cmpi eq, %arg2, %c0_i32_8 : i32
    %11 = arith.extui %10 : i1 to i32
    %c0_i32_9 = arith.constant 0 : i32
    %12 = arith.cmpi ne, %11, %c0_i32_9 : i32
    scf.if %12 {
      %c0_10 = arith.constant 0 : index
      %c0_11 = arith.constant 0 : index
      %13 = vector.load %arg7[%c0_10, %c0_11] : memref<16x96xf32, #tpu.memory_space<vmem>>, vector<16x96xf32>
      %c0_12 = arith.constant 0 : index
      %c0_13 = arith.constant 0 : index
      %14 = vector.load %arg5[%c0_12, %c0_13] : memref<1x96xf32, #tpu.memory_space<vmem>>, vector<1x96xf32>
      %15 = vector.broadcast %14 : vector<1x96xf32> to vector<16x96xf32>
      %16 = arith.addf %13, %15 : vector<16x96xf32>
      %c0_14 = arith.constant 0 : index
      %c0_15 = arith.constant 0 : index
      %17 = vector.load %arg6[%c0_14, %c0_15] : memref<16x96xf32, #tpu.memory_space<vmem>>, vector<16x96xf32>
      tpu.vector_store %arg6[%c0_14, %c0_15], %16 {strides = array<i32>} : memref<16x96xf32, #tpu.memory_space<vmem>>, vector<16x96xf32>,
    } else {
    }
    return
  }
  func.func @transform_0(%arg0: i32, %arg1: i32, %arg2: i32) -> (i32, i32) {
    %c0_i32 = arith.constant 0 : i32
    return %arg0, %arg2 : i32, i32
  }
  func.func @transform_1(%arg0: i32, %arg1: i32, %arg2: i32) -> (i32, i32) {
    %c0_i32 = arith.constant 0 : i32
    return %arg2, %arg1 : i32, i32
  }
  func.func @transform_2(%arg0: i32, %arg1: i32, %arg2: i32) -> (i32, i32) {
    %c0_i32 = arith.constant 0 : i32
    %c0_i32_0 = arith.constant 0 : i32
    return %c0_i32, %arg1 : i32, i32
  }
  func.func @transform_3(%arg0: i32, %arg1: i32, %arg2: i32) -> (i32, i32) {
    %c0_i32 = arith.constant 0 : i32
    return %arg0, %arg1 : i32, i32
  }
}

module attributes {stable_mosaic.version = 11 : i64} {
  func.func @_mha_kernel(%arg0: i32, %arg1: i32, %arg2: memref<1x8x96xf32, #tpu.memory_space<vmem>>, %arg3: memref<1x8x96xf32, #tpu.memory_space<vmem>>, %arg4: memref<1x8x32xf32, #tpu.memory_space<vmem>>) attributes {dimension_semantics = [#tpu.dimension_semantics<parallel>, #tpu.dimension_semantics<parallel>], iteration_bounds = array<i64: 2, 1>, scalar_prefetch = 0 : i64, scratch_operands = 0 : i64, tpu.core_type = #tpu.core_type<tc>, window_params = [{transform_indices = @transform_0, window_bounds = array<i64: 1, 8, 96>}, {transform_indices = @transform_1, window_bounds = array<i64: 1, 8, 96>}, {transform_indices = @transform_2, window_bounds = array<i64: 1, 8, 32>}]} {
    %c0 = arith.constant 0 : index
    %c0_0 = arith.constant 0 : index
    %c0_1 = arith.constant 0 : index
    %0 = vector.load %arg2[%c0, %c0_0, %c0_1] : memref<1x8x96xf32, #tpu.memory_space<vmem>>, vector<1x8x96xf32>
    %1 = vector.shape_cast %0 : vector<1x8x96xf32> to vector<8x96xf32>
    %c0_2 = arith.constant 0 : index
    %c0_3 = arith.constant 0 : index
    %c0_4 = arith.constant 0 : index
    %2 = vector.load %arg3[%c0_2, %c0_3, %c0_4] : memref<1x8x96xf32, #tpu.memory_space<vmem>>, vector<1x8x96xf32>
    %3 = vector.shape_cast %2 : vector<1x8x96xf32> to vector<8x96xf32>
    %4 = vector.extract_strided_slice %1 {offsets = [0, 0], sizes = [8, 8], strides = [1, 1]} : vector<8x96xf32> to vector<8x8xf32>
    %5 = arith.truncf %4 : vector<8x8xf32> to vector<8x8xbf16>
    %6 = vector.extract_strided_slice %3 {offsets = [0, 32], sizes = [8, 8], strides = [1, 1]} : vector<8x96xf32> to vector<8x8xf32>
    %7 = arith.truncf %6 : vector<8x8xf32> to vector<8x8xbf16>
    %8 = vector.extract_strided_slice %3 {offsets = [0, 64], sizes = [8, 8], strides = [1, 1]} : vector<8x96xf32> to vector<8x8xf32>
    %9 = arith.truncf %8 : vector<8x8xf32> to vector<8x8xbf16>
    %cst = arith.constant dense<0.000000e+00> : vector<8x8xf32>
    %10 = tpu.matmul %5, %7, %cst {dimension_numbers = #tpu.dot_dimension_numbers<[1], [1], [0], [0], [0, 0, 1, 0], [], []>} : vector<8x8xbf16>, vector<8x8xbf16>, vector<8x8xf32> -> vector<8x8xf32>
    %cst_5 = arith.constant 0.353553385 : f32
    %11 = vector.broadcast %cst_5 : f32 to vector<8x8xf32>
    %12 = arith.mulf %10, %11 : vector<8x8xf32>
    %cst_6 = arith.constant dense<0xFF800000> : vector<8xf32>
    %13 = vector.multi_reduction <maximumf>, %12, %cst_6 [1] : vector<8x8xf32> to vector<8xf32>
    %14 = vector.shape_cast %13 : vector<8xf32> to vector<8x1xf32>
    %15 = vector.broadcast %14 : vector<8x1xf32> to vector<8x8xf32>
    %16 = arith.subf %12, %15 : vector<8x8xf32>
    %17 = math.exp %16 : vector<8x8xf32>
    %cst_7 = arith.constant dense<0.000000e+00> : vector<8xf32>
    %18 = vector.multi_reduction <add>, %17, %cst_7 [1] : vector<8x8xf32> to vector<8xf32>
    %19 = vector.shape_cast %18 : vector<8xf32> to vector<8x1xf32>
    %20 = tpu.reciprocal %19 {approx = true} : vector<8x1xf32> -> vector<8x1xf32>
    %21 = vector.broadcast %20 : vector<8x1xf32> to vector<8x8xf32>
    %22 = arith.mulf %17, %21 : vector<8x8xf32>
    %23 = arith.truncf %22 : vector<8x8xf32> to vector<8x8xbf16>
    %cst_8 = arith.constant dense<0.000000e+00> : vector<8x8xf32>
    %24 = tpu.matmul %23, %9, %cst_8 {dimension_numbers = #tpu.dot_dimension_numbers<[1], [0], [0], [1], [0, 0, 1, 1], [], []>} : vector<8x8xbf16>, vector<8x8xbf16>, vector<8x8xf32> -> vector<8x8xf32>
    %25 = vector.extract_strided_slice %1 {offsets = [0, 8], sizes = [8, 8], strides = [1, 1]} : vector<8x96xf32> to vector<8x8xf32>
    %26 = arith.truncf %25 : vector<8x8xf32> to vector<8x8xbf16>
    %27 = vector.extract_strided_slice %3 {offsets = [0, 40], sizes = [8, 8], strides = [1, 1]} : vector<8x96xf32> to vector<8x8xf32>
    %28 = arith.truncf %27 : vector<8x8xf32> to vector<8x8xbf16>
    %29 = vector.extract_strided_slice %3 {offsets = [0, 72], sizes = [8, 8], strides = [1, 1]} : vector<8x96xf32> to vector<8x8xf32>
    %30 = arith.truncf %29 : vector<8x8xf32> to vector<8x8xbf16>
    %cst_9 = arith.constant dense<0.000000e+00> : vector<8x8xf32>
    %31 = tpu.matmul %26, %28, %cst_9 {dimension_numbers = #tpu.dot_dimension_numbers<[1], [1], [0], [0], [0, 0, 1, 0], [], []>} : vector<8x8xbf16>, vector<8x8xbf16>, vector<8x8xf32> -> vector<8x8xf32>
    %cst_10 = arith.constant 0.353553385 : f32
    %32 = vector.broadcast %cst_10 : f32 to vector<8x8xf32>
    %33 = arith.mulf %31, %32 : vector<8x8xf32>
    %cst_11 = arith.constant dense<0xFF800000> : vector<8xf32>
    %34 = vector.multi_reduction <maximumf>, %33, %cst_11 [1] : vector<8x8xf32> to vector<8xf32>
    %35 = vector.shape_cast %34 : vector<8xf32> to vector<8x1xf32>
    %36 = vector.broadcast %35 : vector<8x1xf32> to vector<8x8xf32>
    %37 = arith.subf %33, %36 : vector<8x8xf32>
    %38 = math.exp %37 : vector<8x8xf32>
    %cst_12 = arith.constant dense<0.000000e+00> : vector<8xf32>
    %39 = vector.multi_reduction <add>, %38, %cst_12 [1] : vector<8x8xf32> to vector<8xf32>
    %40 = vector.shape_cast %39 : vector<8xf32> to vector<8x1xf32>
    %41 = tpu.reciprocal %40 {approx = true} : vector<8x1xf32> -> vector<8x1xf32>
    %42 = vector.broadcast %41 : vector<8x1xf32> to vector<8x8xf32>
    %43 = arith.mulf %38, %42 : vector<8x8xf32>
    %44 = arith.truncf %43 : vector<8x8xf32> to vector<8x8xbf16>
    %cst_13 = arith.constant dense<0.000000e+00> : vector<8x8xf32>
    %45 = tpu.matmul %44, %30, %cst_13 {dimension_numbers = #tpu.dot_dimension_numbers<[1], [0], [0], [1], [0, 0, 1, 1], [], []>} : vector<8x8xbf16>, vector<8x8xbf16>, vector<8x8xf32> -> vector<8x8xf32>
    %46 = vector.extract_strided_slice %1 {offsets = [0, 16], sizes = [8, 8], strides = [1, 1]} : vector<8x96xf32> to vector<8x8xf32>
    %47 = arith.truncf %46 : vector<8x8xf32> to vector<8x8xbf16>
    %48 = vector.extract_strided_slice %3 {offsets = [0, 48], sizes = [8, 8], strides = [1, 1]} : vector<8x96xf32> to vector<8x8xf32>
    %49 = arith.truncf %48 : vector<8x8xf32> to vector<8x8xbf16>
    %50 = vector.extract_strided_slice %3 {offsets = [0, 80], sizes = [8, 8], strides = [1, 1]} : vector<8x96xf32> to vector<8x8xf32>
    %51 = arith.truncf %50 : vector<8x8xf32> to vector<8x8xbf16>
    %cst_14 = arith.constant dense<0.000000e+00> : vector<8x8xf32>
    %52 = tpu.matmul %47, %49, %cst_14 {dimension_numbers = #tpu.dot_dimension_numbers<[1], [1], [0], [0], [0, 0, 1, 0], [], []>} : vector<8x8xbf16>, vector<8x8xbf16>, vector<8x8xf32> -> vector<8x8xf32>
    %cst_15 = arith.constant 0.353553385 : f32
    %53 = vector.broadcast %cst_15 : f32 to vector<8x8xf32>
    %54 = arith.mulf %52, %53 : vector<8x8xf32>
    %cst_16 = arith.constant dense<0xFF800000> : vector<8xf32>
    %55 = vector.multi_reduction <maximumf>, %54, %cst_16 [1] : vector<8x8xf32> to vector<8xf32>
    %56 = vector.shape_cast %55 : vector<8xf32> to vector<8x1xf32>
    %57 = vector.broadcast %56 : vector<8x1xf32> to vector<8x8xf32>
    %58 = arith.subf %54, %57 : vector<8x8xf32>
    %59 = math.exp %58 : vector<8x8xf32>
    %cst_17 = arith.constant dense<0.000000e+00> : vector<8xf32>
    %60 = vector.multi_reduction <add>, %59, %cst_17 [1] : vector<8x8xf32> to vector<8xf32>
    %61 = vector.shape_cast %60 : vector<8xf32> to vector<8x1xf32>
    %62 = tpu.reciprocal %61 {approx = true} : vector<8x1xf32> -> vector<8x1xf32>
    %63 = vector.broadcast %62 : vector<8x1xf32> to vector<8x8xf32>
    %64 = arith.mulf %59, %63 : vector<8x8xf32>
    %65 = arith.truncf %64 : vector<8x8xf32> to vector<8x8xbf16>
    %cst_18 = arith.constant dense<0.000000e+00> : vector<8x8xf32>
    %66 = tpu.matmul %65, %51, %cst_18 {dimension_numbers = #tpu.dot_dimension_numbers<[1], [0], [0], [1], [0, 0, 1, 1], [], []>} : vector<8x8xbf16>, vector<8x8xbf16>, vector<8x8xf32> -> vector<8x8xf32>
    %67 = vector.extract_strided_slice %1 {offsets = [0, 24], sizes = [8, 8], strides = [1, 1]} : vector<8x96xf32> to vector<8x8xf32>
    %68 = arith.truncf %67 : vector<8x8xf32> to vector<8x8xbf16>
    %69 = vector.extract_strided_slice %3 {offsets = [0, 56], sizes = [8, 8], strides = [1, 1]} : vector<8x96xf32> to vector<8x8xf32>
    %70 = arith.truncf %69 : vector<8x8xf32> to vector<8x8xbf16>
    %71 = vector.extract_strided_slice %3 {offsets = [0, 88], sizes = [8, 8], strides = [1, 1]} : vector<8x96xf32> to vector<8x8xf32>
    %72 = arith.truncf %71 : vector<8x8xf32> to vector<8x8xbf16>
    %cst_19 = arith.constant dense<0.000000e+00> : vector<8x8xf32>
    %73 = tpu.matmul %68, %70, %cst_19 {dimension_numbers = #tpu.dot_dimension_numbers<[1], [1], [0], [0], [0, 0, 1, 0], [], []>} : vector<8x8xbf16>, vector<8x8xbf16>, vector<8x8xf32> -> vector<8x8xf32>
    %cst_20 = arith.constant 0.353553385 : f32
    %74 = vector.broadcast %cst_20 : f32 to vector<8x8xf32>
    %75 = arith.mulf %73, %74 : vector<8x8xf32>
    %cst_21 = arith.constant dense<0xFF800000> : vector<8xf32>
    %76 = vector.multi_reduction <maximumf>, %75, %cst_21 [1] : vector<8x8xf32> to vector<8xf32>
    %77 = vector.shape_cast %76 : vector<8xf32> to vector<8x1xf32>
    %78 = vector.broadcast %77 : vector<8x1xf32> to vector<8x8xf32>
    %79 = arith.subf %75, %78 : vector<8x8xf32>
    %80 = math.exp %79 : vector<8x8xf32>
    %cst_22 = arith.constant dense<0.000000e+00> : vector<8xf32>
    %81 = vector.multi_reduction <add>, %80, %cst_22 [1] : vector<8x8xf32> to vector<8xf32>
    %82 = vector.shape_cast %81 : vector<8xf32> to vector<8x1xf32>
    %83 = tpu.reciprocal %82 {approx = true} : vector<8x1xf32> -> vector<8x1xf32>
    %84 = vector.broadcast %83 : vector<8x1xf32> to vector<8x8xf32>
    %85 = arith.mulf %80, %84 : vector<8x8xf32>
    %86 = arith.truncf %85 : vector<8x8xf32> to vector<8x8xbf16>
    %cst_23 = arith.constant dense<0.000000e+00> : vector<8x8xf32>
    %87 = tpu.matmul %86, %72, %cst_23 {dimension_numbers = #tpu.dot_dimension_numbers<[1], [0], [0], [1], [0, 0, 1, 1], [], []>} : vector<8x8xbf16>, vector<8x8xbf16>, vector<8x8xf32> -> vector<8x8xf32>
    %88 = tpu.concatenate %24, %45, %66, %87 in 1 : vector<8x8xf32>, vector<8x8xf32>, vector<8x8xf32>, vector<8x8xf32> -> vector<8x32xf32>
    %c0_24 = arith.constant 0 : index
    %c0_25 = arith.constant 0 : index
    %c0_26 = arith.constant 0 : index
    %89 = vector.load %arg4[%c0_24, %c0_25, %c0_26] : memref<1x8x32xf32, #tpu.memory_space<vmem>>, vector<1x8x32xf32>
    %90 = vector.shape_cast %89 : vector<1x8x32xf32> to vector<8x32xf32>
    %91 = vector.shape_cast %88 : vector<8x32xf32> to vector<1x8x32xf32>
    tpu.vector_store %arg4[%c0_24, %c0_25, %c0_26], %91 {strides = array<i32>} : memref<1x8x32xf32, #tpu.memory_space<vmem>>, vector<1x8x32xf32>,
    return
  }
  func.func @transform_0(%arg0: i32, %arg1: i32) -> (i32, i32, i32) {
    %c0_i32 = arith.constant 0 : i32
    %c0_i32_0 = arith.constant 0 : i32
    return %arg0, %arg1, %c0_i32 : i32, i32, i32
  }
  func.func @transform_1(%arg0: i32, %arg1: i32) -> (i32, i32, i32) {
    %c0_i32 = arith.constant 0 : i32
    %c0_i32_0 = arith.constant 0 : i32
    %c0_i32_1 = arith.constant 0 : i32
    return %arg0, %c0_i32, %c0_i32_0 : i32, i32, i32
  }
  func.func @transform_2(%arg0: i32, %arg1: i32) -> (i32, i32, i32) {
    %c0_i32 = arith.constant 0 : i32
    %c0_i32_0 = arith.constant 0 : i32
    return %arg0, %arg1, %c0_i32 : i32, i32, i32
  }
}

module attributes {stable_mosaic.version = 11 : i64} {
  func.func @_linear_kernel(%arg0: i32, %arg1: i32, %arg2: i32, %arg3: memref<16x16xf32, #tpu.memory_space<vmem>>, %arg4: memref<16x32xbf16, #tpu.memory_space<vmem>>, %arg5: memref<1x32xf32, #tpu.memory_space<vmem>>, %arg6: memref<16x32xf32, #tpu.memory_space<vmem>>, %arg7: memref<16x32xf32, #tpu.memory_space<vmem>>) attributes {dimension_semantics = [#tpu.dimension_semantics<parallel>, #tpu.dimension_semantics<parallel>, #tpu.dimension_semantics<arbitrary>], iteration_bounds = array<i64: 1, 1, 1>, scalar_prefetch = 0 : i64, scratch_operands = 1 : i64, tpu.core_type = #tpu.core_type<tc>, window_params = [{transform_indices = @transform_0, window_bounds = array<i64: 16, 16>}, {transform_indices = @transform_1, window_bounds = array<i64: 16, 32>}, {transform_indices = @transform_2, window_bounds = array<i64: 1, 32>}, {transform_indices = @transform_3, window_bounds = array<i64: 16, 32>}]} {
    %c0_i32 = arith.constant 0 : i32
    %0 = arith.cmpi eq, %arg2, %c0_i32 : i32
    %1 = arith.extui %0 : i1 to i32
    %c0_i32_0 = arith.constant 0 : i32
    %2 = arith.cmpi ne, %1, %c0_i32_0 : i32
    scf.if %2 {
      %cst_10 = arith.constant 0.000000e+00 : f32
      %13 = vector.broadcast %cst_10 : f32 to vector<16x32xf32>
      %c0_11 = arith.constant 0 : index
      %c0_12 = arith.constant 0 : index
      %14 = vector.load %arg7[%c0_11, %c0_12] : memref<16x32xf32, #tpu.memory_space<vmem>>, vector<16x32xf32>
      tpu.vector_store %arg7[%c0_11, %c0_12], %13 {strides = array<i32>} : memref<16x32xf32, #tpu.memory_space<vmem>>, vector<16x32xf32>,
    } else {
    }
    %c0 = arith.constant 0 : index
    %c0_1 = arith.constant 0 : index
    %3 = vector.load %arg7[%c0, %c0_1] : memref<16x32xf32, #tpu.memory_space<vmem>>, vector<16x32xf32>
    %c0_2 = arith.constant 0 : index
    %c0_3 = arith.constant 0 : index
    %4 = vector.load %arg3[%c0_2, %c0_3] : memref<16x16xf32, #tpu.memory_space<vmem>>, vector<16x16xf32>
    %5 = arith.truncf %4 : vector<16x16xf32> to vector<16x16xbf16>
    %c0_4 = arith.constant 0 : index
    %c0_5 = arith.constant 0 : index
    %6 = vector.load %arg4[%c0_4, %c0_5] : memref<16x32xbf16, #tpu.memory_space<vmem>>, vector<16x32xbf16>
    %cst = arith.constant dense<0.000000e+00> : vector<16x32xf32>
    %7 = tpu.matmul %5, %6, %cst {dimension_numbers = #tpu.dot_dimension_numbers<[1], [0], [0], [1], [0, 0, 1, 1], [], []>} : vector<16x16xbf16>, vector<16x32xbf16>, vector<16x32xf32> -> vector<16x32xf32>
    %8 = arith.addf %3, %7 : vector<16x32xf32>
    %c0_6 = arith.constant 0 : index
    %c0_7 = arith.constant 0 : index
    %9 = vector.load %arg7[%c0_6, %c0_7] : memref<16x32xf32, #tpu.memory_space<vmem>>, vector<16x32xf32>
    tpu.vector_store %arg7[%c0_6, %c0_7], %8 {strides = array<i32>} : memref<16x32xf32, #tpu.memory_space<vmem>>, vector<16x32xf32>,
    %c0_i32_8 = arith.constant 0 : i32
    %10 = arith.cmpi eq, %arg2, %c0_i32_8 : i32
    %11 = arith.extui %10 : i1 to i32
    %c0_i32_9 = arith.constant 0 : i32
    %12 = arith.cmpi ne, %11, %c0_i32_9 : i32
    scf.if %12 {
      %c0_10 = arith.constant 0 : index
      %c0_11 = arith.constant 0 : index
      %13 = vector.load %arg7[%c0_10, %c0_11] : memref<16x32xf32, #tpu.memory_space<vmem>>, vector<16x32xf32>
      %c0_12 = arith.constant 0 : index
      %c0_13 = arith.constant 0 : index
      %14 = vector.load %arg5[%c0_12, %c0_13] : memref<1x32xf32, #tpu.memory_space<vmem>>, vector<1x32xf32>
      %15 = vector.broadcast %14 : vector<1x32xf32> to vector<16x32xf32>
      %16 = arith.addf %13, %15 : vector<16x32xf32>
      %c0_14 = arith.constant 0 : index
      %c0_15 = arith.constant 0 : index
      %17 = vector.load %arg6[%c0_14, %c0_15] : memref<16x32xf32, #tpu.memory_space<vmem>>, vector<16x32xf32>
      tpu.vector_store %arg6[%c0_14, %c0_15], %16 {strides = array<i32>} : memref<16x32xf32, #tpu.memory_space<vmem>>, vector<16x32xf32>,
    } else {
    }
    return
  }
  func.func @transform_0(%arg0: i32, %arg1: i32, %arg2: i32) -> (i32, i32) {
    %c0_i32 = arith.constant 0 : i32
    return %arg0, %arg2 : i32, i32
  }
  func.func @transform_1(%arg0: i32, %arg1: i32, %arg2: i32) -> (i32, i32) {
    %c0_i32 = arith.constant 0 : i32
    return %arg2, %arg1 : i32, i32
  }
  func.func @transform_2(%arg0: i32, %arg1: i32, %arg2: i32) -> (i32, i32) {
    %c0_i32 = arith.constant 0 : i32
    %c0_i32_0 = arith.constant 0 : i32
    return %c0_i32, %arg1 : i32, i32
  }
  func.func @transform_3(%arg0: i32, %arg1: i32, %arg2: i32) -> (i32, i32) {
    %c0_i32 = arith.constant 0 : i32
    return %arg0, %arg1 : i32, i32
  }
}

module attributes {stable_mosaic.version = 11 : i64} {
  func.func @_linear_addln_kernel(%arg0: i32, %arg1: i32, %arg2: memref<16x32xf32, #tpu.memory_space<vmem>>, %arg3: memref<32x32xbf16, #tpu.memory_space<vmem>>, %arg4: memref<1x32xf32, #tpu.memory_space<vmem>>, %arg5: memref<16x32xf32, #tpu.memory_space<vmem>>, %arg6: memref<1x32xf32, #tpu.memory_space<vmem>>, %arg7: memref<1x32xf32, #tpu.memory_space<vmem>>, %arg8: memref<16x32xf32, #tpu.memory_space<vmem>>, %arg9: memref<16x32xf32, #tpu.memory_space<vmem>>) attributes {dimension_semantics = [#tpu.dimension_semantics<parallel>, #tpu.dimension_semantics<arbitrary>], iteration_bounds = array<i64: 1, 1>, scalar_prefetch = 0 : i64, scratch_operands = 1 : i64, tpu.core_type = #tpu.core_type<tc>, window_params = [{transform_indices = @transform_0, window_bounds = array<i64: 16, 32>}, {transform_indices = @transform_1, window_bounds = array<i64: 32, 32>}, {pipeline_mode = #tpu.pipeline_mode<synchronous>, transform_indices = @transform_2, window_bounds = array<i64: 1, 32>}, {transform_indices = @transform_3, window_bounds = array<i64: 16, 32>}, {pipeline_mode = #tpu.pipeline_mode<synchronous>, transform_indices = @transform_4, window_bounds = array<i64: 1, 32>}, {pipeline_mode = #tpu.pipeline_mode<synchronous>, transform_indices = @transform_5, window_bounds = array<i64: 1, 32>}, {transform_indices = @transform_6, window_bounds = array<i64: 16, 32>}]} {
    %c0_i32 = arith.constant 0 : i32
    %0 = arith.cmpi eq, %arg1, %c0_i32 : i32
    %1 = arith.extui %0 : i1 to i32
    %c0_i32_0 = arith.constant 0 : i32
    %2 = arith.cmpi ne, %1, %c0_i32_0 : i32
    scf.if %2 {
      %cst_10 = arith.constant 0.000000e+00 : f32
      %13 = vector.broadcast %cst_10 : f32 to vector<16x32xf32>
      %c0_11 = arith.constant 0 : index
      %c0_12 = arith.constant 0 : index
      %14 = vector.load %arg9[%c0_11, %c0_12] : memref<16x32xf32, #tpu.memory_space<vmem>>, vector<16x32xf32>
      tpu.vector_store %arg9[%c0_11, %c0_12], %13 {strides = array<i32>} : memref<16x32xf32, #tpu.memory_space<vmem>>, vector<16x32xf32>,
    } else {
    }
    %c0 = arith.constant 0 : index
    %c0_1 = arith.constant 0 : index
    %3 = vector.load %arg9[%c0, %c0_1] : memref<16x32xf32, #tpu.memory_space<vmem>>, vector<16x32xf32>
    %c0_2 = arith.constant 0 : index
    %c0_3 = arith.constant 0 : index
    %4 = vector.load %arg2[%c0_2, %c0_3] : memref<16x32xf32, #tpu.memory_space<vmem>>, vector<16x32xf32>
    %5 = arith.truncf %4 : vector<16x32xf32> to vector<16x32xbf16>
    %c0_4 = arith.constant 0 : index
    %c0_5 = arith.constant 0 : index
    %6 = vector.load %arg3[%c0_4, %c0_5] : memref<32x32xbf16, #tpu.memory_space<vmem>>, vector<32x32xbf16>
    %cst = arith.constant dense<0.000000e+00> : vector<16x32xf32>
    %7 = tpu.matmul %5, %6, %cst {dimension_numbers = #tpu.dot_dimension_numbers<[1], [0], [0], [1], [0, 0, 1, 1], [], []>} : vector<16x32xbf16>, vector<32x32xbf16>, vector<16x32xf32> -> vector<16x32xf32>
    %8 = arith.addf %3, %7 : vector<16x32xf32>
    %c0_6 = arith.constant 0 : index
    %c0_7 = arith.constant 0 : index
    %9 = vector.load %arg9[%c0_6, %c0_7] : memref<16x32xf32, #tpu.memory_space<vmem>>, vector<16x32xf32>
    tpu.vector_store %arg9[%c0_6, %c0_7], %8 {strides = array<i32>} : memref<16x32xf32, #tpu.memory_space<vmem>>, vector<16x32xf32>,
    %c0_i32_8 = arith.constant 0 : i32
    %10 = arith.cmpi eq, %arg1, %c0_i32_8 : i32
    %11 = arith.extui %10 : i1 to i32
    %c0_i32_9 = arith.constant 0 : i32
    %12 = arith.cmpi ne, %11, %c0_i32_9 : i32
    scf.if %12 {
      %c0_10 = arith.constant 0 : index
      %c0_11 = arith.constant 0 : index
      %13 = vector.load %arg9[%c0_10, %c0_11] : memref<16x32xf32, #tpu.memory_space<vmem>>, vector<16x32xf32>
      %c0_12 = arith.constant 0 : index
      %c0_13 = arith.constant 0 : index
      %14 = vector.load %arg4[%c0_12, %c0_13] : memref<1x32xf32, #tpu.memory_space<vmem>>, vector<1x32xf32>
      %15 = vector.broadcast %14 : vector<1x32xf32> to vector<16x32xf32>
      %16 = arith.addf %13, %15 : vector<16x32xf32>
      %c0_14 = arith.constant 0 : index
      %c0_15 = arith.constant 0 : index
      %17 = vector.load %arg5[%c0_14, %c0_15] : memref<16x32xf32, #tpu.memory_space<vmem>>, vector<16x32xf32>
      %18 = arith.addf %16, %17 : vector<16x32xf32>
      %cst_16 = arith.constant dense<0.000000e+00> : vector<16xf32>
      %19 = vector.multi_reduction <add>, %18, %cst_16 [1] : vector<16x32xf32> to vector<16xf32>
      %20 = vector.shape_cast %19 : vector<16xf32> to vector<16x1xf32>
      %cst_17 = arith.constant 3.200000e+01 : f32
      %21 = vector.broadcast %cst_17 : f32 to vector<16x1xf32>
      %22 = arith.divf %20, %21 : vector<16x1xf32>
      %23 = vector.broadcast %22 : vector<16x1xf32> to vector<16x32xf32>
      %24 = arith.subf %18, %23 : vector<16x32xf32>
      %25 = arith.mulf %24, %24 : vector<16x32xf32>
      %cst_18 = arith.constant dense<0.000000e+00> : vector<16xf32>
      %26 = vector.multi_reduction <add>, %25, %cst_18 [1] : vector<16x32xf32> to vector<16xf32>
      %27 = vector.shape_cast %26 : vector<16xf32> to vector<16x1xf32>
      %cst_19 = arith.constant 3.200000e+01 : f32
      %28 = vector.broadcast %cst_19 : f32 to vector<16x1xf32>
      %29 = arith.divf %27, %28 : vector<16x1xf32>
      %30 = vector.broadcast %22 : vector<16x1xf32> to vector<16x32xf32>
      %31 = arith.subf %18, %30 : vector<16x32xf32>
      %cst_20 = arith.constant 9.99999974E-6 : f32
      %32 = vector.broadcast %cst_20 : f32 to vector<16x1xf32>
      %33 = arith.addf %29, %32 : vector<16x1xf32>
      %34 = math.rsqrt %33 : vector<16x1xf32>
      %35 = vector.broadcast %34 : vector<16x1xf32> to vector<16x32xf32>
      %36 = arith.mulf %31, %35 : vector<16x32xf32>
      %c0_21 = arith.constant 0 : index
      %c0_22 = arith.constant 0 : index
      %37 = vector.load %arg6[%c0_21, %c0_22] : memref<1x32xf32, #tpu.memory_space<vmem>>, vector<1x32xf32>
      %38 = vector.broadcast %37 : vector<1x32xf32> to vector<16x32xf32>
      %39 = arith.mulf %36, %38 : vector<16x32xf32>
      %c0_23 = arith.constant 0 : index
      %c0_24 = arith.constant 0 : index
      %40 = vector.load %arg7[%c0_23, %c0_24] : memref<1x32xf32, #tpu.memory_space<vmem>>, vector<1x32xf32>
      %41 = vector.broadcast %40 : vector<1x32xf32> to vector<16x32xf32>
      %42 = arith.addf %39, %41 : vector<16x32xf32>
      %c0_25 = arith.constant 0 : index
      %c0_26 = arith.constant 0 : index
      %43 = vector.load %arg8[%c0_25, %c0_26] : memref<16x32xf32, #tpu.memory_space<vmem>>, vector<16x32xf32>
      tpu.vector_store %arg8[%c0_25, %c0_26], %42 {strides = array<i32>} : memref<16x32xf32, #tpu.memory_space<vmem>>, vector<16x32xf32>,
    } else {
    }
    return
  }
  func.func @transform_0(%arg0: i32, %arg1: i32) -> (i32, i32) {
    %c0_i32 = arith.constant 0 : i32
    return %arg0, %arg1 : i32, i32
  }
  func.func @transform_1(%arg0: i32, %arg1: i32) -> (i32, i32) {
    %c0_i32 = arith.constant 0 : i32
    %c0_i32_0 = arith.constant 0 : i32
    return %arg1, %c0_i32 : i32, i32
  }
  func.func @transform_2(%arg0: i32, %arg1: i32) -> (i32, i32) {
    %c0_i32 = arith.constant 0 : i32
    %c0_i32_0 = arith.constant 0 : i32
    %c0_i32_1 = arith.constant 0 : i32
    return %c0_i32, %c0_i32_0 : i32, i32
  }
  func.func @transform_3(%arg0: i32, %arg1: i32) -> (i32, i32) {
    %c0_i32 = arith.constant 0 : i32
    %c0_i32_0 = arith.constant 0 : i32
    return %arg0, %c0_i32 : i32, i32
  }
  func.func @transform_4(%arg0: i32, %arg1: i32) -> (i32, i32) {
    %c0_i32 = arith.constant 0 : i32
    %c0_i32_0 = arith.constant 0 : i32
    %c0_i32_1 = arith.constant 0 : i32
    return %c0_i32, %c0_i32_0 : i32, i32
  }
  func.func @transform_5(%arg0: i32, %arg1: i32) -> (i32, i32) {
    %c0_i32 = arith.constant 0 : i32
    %c0_i32_0 = arith.constant 0 : i32
    %c0_i32_1 = arith.constant 0 : i32
    return %c0_i32, %c0_i32_0 : i32, i32
  }
  func.func @transform_6(%arg0: i32, %arg1: i32) -> (i32, i32) {
    %c0_i32 = arith.constant 0 : i32
    %c0_i32_0 = arith.constant 0 : i32
    return %arg0, %c0_i32 : i32, i32
  }
}

module attributes {stable_mosaic.version = 11 : i64} {
  func.func @_linear_kernel(%arg0: i32, %arg1: i32, %arg2: i32, %arg3: memref<16x32xf32, #tpu.memory_space<vmem>>, %arg4: memref<32x8xbf16, #tpu.memory_space<vmem>>, %arg5: memref<1x8xf32, #tpu.memory_space<vmem>>, %arg6: memref<16x8xf32, #tpu.memory_space<vmem>>, %arg7: memref<16x8xf32, #tpu.memory_space<vmem>>) attributes {dimension_semantics = [#tpu.dimension_semantics<parallel>, #tpu.dimension_semantics<parallel>, #tpu.dimension_semantics<arbitrary>], iteration_bounds = array<i64: 1, 1, 1>, scalar_prefetch = 0 : i64, scratch_operands = 1 : i64, tpu.core_type = #tpu.core_type<tc>, window_params = [{transform_indices = @transform_0, window_bounds = array<i64: 16, 32>}, {transform_indices = @transform_1, window_bounds = array<i64: 32, 8>}, {transform_indices = @transform_2, window_bounds = array<i64: 1, 8>}, {transform_indices = @transform_3, window_bounds = array<i64: 16, 8>}]} {
    %c0_i32 = arith.constant 0 : i32
    %0 = arith.cmpi eq, %arg2, %c0_i32 : i32
    %1 = arith.extui %0 : i1 to i32
    %c0_i32_0 = arith.constant 0 : i32
    %2 = arith.cmpi ne, %1, %c0_i32_0 : i32
    scf.if %2 {
      %cst_10 = arith.constant 0.000000e+00 : f32
      %13 = vector.broadcast %cst_10 : f32 to vector<16x8xf32>
      %c0_11 = arith.constant 0 : index
      %c0_12 = arith.constant 0 : index
      %14 = vector.load %arg7[%c0_11, %c0_12] : memref<16x8xf32, #tpu.memory_space<vmem>>, vector<16x8xf32>
      tpu.vector_store %arg7[%c0_11, %c0_12], %13 {strides = array<i32>} : memref<16x8xf32, #tpu.memory_space<vmem>>, vector<16x8xf32>,
    } else {
    }
    %c0 = arith.constant 0 : index
    %c0_1 = arith.constant 0 : index
    %3 = vector.load %arg7[%c0, %c0_1] : memref<16x8xf32, #tpu.memory_space<vmem>>, vector<16x8xf32>
    %c0_2 = arith.constant 0 : index
    %c0_3 = arith.constant 0 : index
    %4 = vector.load %arg3[%c0_2, %c0_3] : memref<16x32xf32, #tpu.memory_space<vmem>>, vector<16x32xf32>
    %5 = arith.truncf %4 : vector<16x32xf32> to vector<16x32xbf16>
    %c0_4 = arith.constant 0 : index
    %c0_5 = arith.constant 0 : index
    %6 = vector.load %arg4[%c0_4, %c0_5] : memref<32x8xbf16, #tpu.memory_space<vmem>>, vector<32x8xbf16>
    %cst = arith.constant dense<0.000000e+00> : vector<16x8xf32>
    %7 = tpu.matmul %5, %6, %cst {dimension_numbers = #tpu.dot_dimension_numbers<[1], [0], [0], [1], [0, 0, 1, 1], [], []>} : vector<16x32xbf16>, vector<32x8xbf16>, vector<16x8xf32> -> vector<16x8xf32>
    %8 = arith.addf %3, %7 : vector<16x8xf32>
    %c0_6 = arith.constant 0 : index
    %c0_7 = arith.constant 0 : index
    %9 = vector.load %arg7[%c0_6, %c0_7] : memref<16x8xf32, #tpu.memory_space<vmem>>, vector<16x8xf32>
    tpu.vector_store %arg7[%c0_6, %c0_7], %8 {strides = array<i32>} : memref<16x8xf32, #tpu.memory_space<vmem>>, vector<16x8xf32>,
    %c0_i32_8 = arith.constant 0 : i32
    %10 = arith.cmpi eq, %arg2, %c0_i32_8 : i32
    %11 = arith.extui %10 : i1 to i32
    %c0_i32_9 = arith.constant 0 : i32
    %12 = arith.cmpi ne, %11, %c0_i32_9 : i32
    scf.if %12 {
      %c0_10 = arith.constant 0 : index
      %c0_11 = arith.constant 0 : index
      %13 = vector.load %arg7[%c0_10, %c0_11] : memref<16x8xf32, #tpu.memory_space<vmem>>, vector<16x8xf32>
      %c0_12 = arith.constant 0 : index
      %c0_13 = arith.constant 0 : index
      %14 = vector.load %arg5[%c0_12, %c0_13] : memref<1x8xf32, #tpu.memory_space<vmem>>, vector<1x8xf32>
      %15 = vector.broadcast %14 : vector<1x8xf32> to vector<16x8xf32>
      %16 = arith.addf %13, %15 : vector<16x8xf32>
      %c0_14 = arith.constant 0 : index
      %c0_15 = arith.constant 0 : index
      %17 = vector.load %arg6[%c0_14, %c0_15] : memref<16x8xf32, #tpu.memory_space<vmem>>, vector<16x8xf32>
      tpu.vector_store %arg6[%c0_14, %c0_15], %16 {strides = array<i32>} : memref<16x8xf32, #tpu.memory_space<vmem>>, vector<16x8xf32>,
    } else {
    }
    return
  }
  func.func @transform_0(%arg0: i32, %arg1: i32, %arg2: i32) -> (i32, i32) {
    %c0_i32 = arith.constant 0 : i32
    return %arg0, %arg2 : i32, i32
  }
  func.func @transform_1(%arg0: i32, %arg1: i32, %arg2: i32) -> (i32, i32) {
    %c0_i32 = arith.constant 0 : i32
    return %arg2, %arg1 : i32, i32
  }
  func.func @transform_2(%arg0: i32, %arg1: i32, %arg2: i32) -> (i32, i32) {
    %c0_i32 = arith.constant 0 : i32
    %c0_i32_0 = arith.constant 0 : i32
    return %c0_i32, %arg1 : i32, i32
  }
  func.func @transform_3(%arg0: i32, %arg1: i32, %arg2: i32) -> (i32, i32) {
    %c0_i32 = arith.constant 0 : i32
    return %arg0, %arg1 : i32, i32
  }
}

module attributes {stable_mosaic.version = 11 : i64} {
  func.func @_ffn_addln_kernel(%arg0: i32, %arg1: memref<16x32xf32, #tpu.memory_space<vmem>>, %arg2: memref<32x32xbf16, #tpu.memory_space<vmem>>, %arg3: memref<1x32xf32, #tpu.memory_space<vmem>>, %arg4: memref<32x32xbf16, #tpu.memory_space<vmem>>, %arg5: memref<1x32xf32, #tpu.memory_space<vmem>>, %arg6: memref<16x32xf32, #tpu.memory_space<vmem>>, %arg7: memref<1x32xf32, #tpu.memory_space<vmem>>, %arg8: memref<1x32xf32, #tpu.memory_space<vmem>>, %arg9: memref<16x32xf32, #tpu.memory_space<vmem>>) attributes {dimension_semantics = [#tpu.dimension_semantics<parallel>], iteration_bounds = array<i64: 1>, scalar_prefetch = 0 : i64, scratch_operands = 0 : i64, tpu.core_type = #tpu.core_type<tc>, window_params = [{transform_indices = @transform_0, window_bounds = array<i64: 16, 32>}, {pipeline_mode = #tpu.pipeline_mode<synchronous>, transform_indices = @transform_1, window_bounds = array<i64: 32, 32>}, {pipeline_mode = #tpu.pipeline_mode<synchronous>, transform_indices = @transform_2, window_bounds = array<i64: 1, 32>}, {pipeline_mode = #tpu.pipeline_mode<synchronous>, transform_indices = @transform_3, window_bounds = array<i64: 32, 32>}, {pipeline_mode = #tpu.pipeline_mode<synchronous>, transform_indices = @transform_4, window_bounds = array<i64: 1, 32>}, {transform_indices = @transform_5, window_bounds = array<i64: 16, 32>}, {pipeline_mode = #tpu.pipeline_mode<synchronous>, transform_indices = @transform_6, window_bounds = array<i64: 1, 32>}, {pipeline_mode = #tpu.pipeline_mode<synchronous>, transform_indices = @transform_7, window_bounds = array<i64: 1, 32>}, {transform_indices = @transform_8, window_bounds = array<i64: 16, 32>}]} {
    %c0 = arith.constant 0 : index
    %c0_0 = arith.constant 0 : index
    %0 = vector.load %arg1[%c0, %c0_0] : memref<16x32xf32, #tpu.memory_space<vmem>>, vector<16x32xf32>
    %1 = arith.truncf %0 : vector<16x32xf32> to vector<16x32xbf16>
    %c0_1 = arith.constant 0 : index
    %c0_2 = arith.constant 0 : index
    %2 = vector.load %arg2[%c0_1, %c0_2] : memref<32x32xbf16, #tpu.memory_space<vmem>>, vector<32x32xbf16>
    %cst = arith.constant dense<0.000000e+00> : vector<16x32xf32>
    %3 = tpu.matmul %1, %2, %cst {dimension_numbers = #tpu.dot_dimension_numbers<[1], [0], [0], [1], [0, 0, 1, 1], [], []>} : vector<16x32xbf16>, vector<32x32xbf16>, vector<16x32xf32> -> vector<16x32xf32>
    %c0_3 = arith.constant 0 : index
    %c0_4 = arith.constant 0 : index
    %4 = vector.load %arg3[%c0_3, %c0_4] : memref<1x32xf32, #tpu.memory_space<vmem>>, vector<1x32xf32>
    %5 = vector.broadcast %4 : vector<1x32xf32> to vector<16x32xf32>
    %6 = arith.addf %3, %5 : vector<16x32xf32>
    %cst_5 = arith.constant 0.000000e+00 : f32
    %7 = vector.broadcast %cst_5 : f32 to vector<16x32xf32>
    %8 = arith.maximumf %6, %7 : vector<16x32xf32>
    %9 = arith.truncf %8 : vector<16x32xf32> to vector<16x32xbf16>
    %c0_6 = arith.constant 0 : index
    %c0_7 = arith.constant 0 : index
    %10 = vector.load %arg4[%c0_6, %c0_7] : memref<32x32xbf16, #tpu.memory_space<vmem>>, vector<32x32xbf16>
    %cst_8 = arith.constant dense<0.000000e+00> : vector<16x32xf32>
    %11 = tpu.matmul %9, %10, %cst_8 {dimension_numbers = #tpu.dot_dimension_numbers<[1], [0], [0], [1], [0, 0, 1, 1], [], []>} : vector<16x32xbf16>, vector<32x32xbf16>, vector<16x32xf32> -> vector<16x32xf32>
    %c0_9 = arith.constant 0 : index
    %c0_10 = arith.constant 0 : index
    %12 = vector.load %arg5[%c0_9, %c0_10] : memref<1x32xf32, #tpu.memory_space<vmem>>, vector<1x32xf32>
    %13 = vector.broadcast %12 : vector<1x32xf32> to vector<16x32xf32>
    %14 = arith.addf %11, %13 : vector<16x32xf32>
    %c0_11 = arith.constant 0 : index
    %c0_12 = arith.constant 0 : index
    %15 = vector.load %arg6[%c0_11, %c0_12] : memref<16x32xf32, #tpu.memory_space<vmem>>, vector<16x32xf32>
    %16 = arith.addf %14, %15 : vector<16x32xf32>
    %cst_13 = arith.constant dense<0.000000e+00> : vector<16xf32>
    %17 = vector.multi_reduction <add>, %16, %cst_13 [1] : vector<16x32xf32> to vector<16xf32>
    %18 = vector.shape_cast %17 : vector<16xf32> to vector<16x1xf32>
    %cst_14 = arith.constant 3.200000e+01 : f32
    %19 = vector.broadcast %cst_14 : f32 to vector<16x1xf32>
    %20 = arith.divf %18, %19 : vector<16x1xf32>
    %21 = vector.broadcast %20 : vector<16x1xf32> to vector<16x32xf32>
    %22 = arith.subf %16, %21 : vector<16x32xf32>
    %23 = arith.mulf %22, %22 : vector<16x32xf32>
    %cst_15 = arith.constant dense<0.000000e+00> : vector<16xf32>
    %24 = vector.multi_reduction <add>, %23, %cst_15 [1] : vector<16x32xf32> to vector<16xf32>
    %25 = vector.shape_cast %24 : vector<16xf32> to vector<16x1xf32>
    %cst_16 = arith.constant 3.200000e+01 : f32
    %26 = vector.broadcast %cst_16 : f32 to vector<16x1xf32>
    %27 = arith.divf %25, %26 : vector<16x1xf32>
    %28 = vector.broadcast %20 : vector<16x1xf32> to vector<16x32xf32>
    %29 = arith.subf %16, %28 : vector<16x32xf32>
    %cst_17 = arith.constant 9.99999974E-6 : f32
    %30 = vector.broadcast %cst_17 : f32 to vector<16x1xf32>
    %31 = arith.addf %27, %30 : vector<16x1xf32>
    %32 = math.rsqrt %31 : vector<16x1xf32>
    %33 = vector.broadcast %32 : vector<16x1xf32> to vector<16x32xf32>
    %34 = arith.mulf %29, %33 : vector<16x32xf32>
    %c0_18 = arith.constant 0 : index
    %c0_19 = arith.constant 0 : index
    %35 = vector.load %arg7[%c0_18, %c0_19] : memref<1x32xf32, #tpu.memory_space<vmem>>, vector<1x32xf32>
    %36 = vector.broadcast %35 : vector<1x32xf32> to vector<16x32xf32>
    %37 = arith.mulf %34, %36 : vector<16x32xf32>
    %c0_20 = arith.constant 0 : index
    %c0_21 = arith.constant 0 : index
    %38 = vector.load %arg8[%c0_20, %c0_21] : memref<1x32xf32, #tpu.memory_space<vmem>>, vector<1x32xf32>
    %39 = vector.broadcast %38 : vector<1x32xf32> to vector<16x32xf32>
    %40 = arith.addf %37, %39 : vector<16x32xf32>
    %c0_22 = arith.constant 0 : index
    %c0_23 = arith.constant 0 : index
    %41 = vector.load %arg9[%c0_22, %c0_23] : memref<16x32xf32, #tpu.memory_space<vmem>>, vector<16x32xf32>
    tpu.vector_store %arg9[%c0_22, %c0_23], %40 {strides = array<i32>} : memref<16x32xf32, #tpu.memory_space<vmem>>, vector<16x32xf32>,
    return
  }
  func.func @transform_0(%arg0: i32) -> (i32, i32) {
    %c0_i32 = arith.constant 0 : i32
    %c0_i32_0 = arith.constant 0 : i32
    return %arg0, %c0_i32 : i32, i32
  }
  func.func @transform_1(%arg0: i32) -> (i32, i32) {
    %c0_i32 = arith.constant 0 : i32
    %c0_i32_0 = arith.constant 0 : i32
    %c0_i32_1 = arith.constant 0 : i32
    return %c0_i32, %c0_i32_0 : i32, i32
  }
  func.func @transform_2(%arg0: i32) -> (i32, i32) {
    %c0_i32 = arith.constant 0 : i32
    %c0_i32_0 = arith.constant 0 : i32
    %c0_i32_1 = arith.constant 0 : i32
    return %c0_i32, %c0_i32_0 : i32, i32
  }
  func.func @transform_3(%arg0: i32) -> (i32, i32) {
    %c0_i32 = arith.constant 0 : i32
    %c0_i32_0 = arith.constant 0 : i32
    %c0_i32_1 = arith.constant 0 : i32
    return %c0_i32, %c0_i32_0 : i32, i32
  }
  func.func @transform_4(%arg0: i32) -> (i32, i32) {
    %c0_i32 = arith.constant 0 : i32
    %c0_i32_0 = arith.constant 0 : i32
    %c0_i32_1 = arith.constant 0 : i32
    return %c0_i32, %c0_i32_0 : i32, i32
  }
  func.func @transform_5(%arg0: i32) -> (i32, i32) {
    %c0_i32 = arith.constant 0 : i32
    %c0_i32_0 = arith.constant 0 : i32
    return %arg0, %c0_i32 : i32, i32
  }
  func.func @transform_6(%arg0: i32) -> (i32, i32) {
    %c0_i32 = arith.constant 0 : i32
    %c0_i32_0 = arith.constant 0 : i32
    %c0_i32_1 = arith.constant 0 : i32
    return %c0_i32, %c0_i32_0 : i32, i32
  }
  func.func @transform_7(%arg0: i32) -> (i32, i32) {
    %c0_i32 = arith.constant 0 : i32
    %c0_i32_0 = arith.constant 0 : i32
    %c0_i32_1 = arith.constant 0 : i32
    return %c0_i32, %c0_i32_0 : i32, i32
  }
  func.func @transform_8(%arg0: i32) -> (i32, i32) {
    %c0_i32 = arith.constant 0 : i32
    %c0_i32_0 = arith.constant 0 : i32
    return %arg0, %c0_i32 : i32, i32
  }
}

</mosaic_0001>

<llo_original>
// kernel: transformer_forward.10
$region0: #{transformer_forward.10}
  #allocation0 [shape = 'u32[]', space=smem, size = 0x4, offset = 0x4, fixed_abs, tag = 'smem constant byte address 0x4 - core index']
  #allocation1 [shape = 'u32[144,128]{1,0:T(1,128)}', space=vmem, size = 0x12000, scoped, tag = 'internal scratch']
  #allocation2 [shape = 'f32[16,32]{1,0:T(8,128)}', space=vmem, size = 0x2000, scoped, tag = 'scratch operand']
  %s0 = inlined_call_operand.vmem [shape: f32[16,16], index: 0, kind: input, shape index: {}]
  %s1 = inlined_call_operand.vmem [shape: bf16[16,32], index: 1, kind: input, shape index: {}]
  %s2 = inlined_call_operand.vmem [shape: f32[1,32], index: 2, kind: input, shape index: {}]
  %s3 = inlined_call_operand.vmem [shape: f32[16,32], index: 3, kind: output, shape index: {}]
  %s4 = sld [smem:[#allocation0]]
  $region30: #{transformer_forward.10} parent=0
    _
  %s6 = ssub.s32 1, %s4
  %s7 = scalar_select 0, %s6, %s4
  // Predicated region
  $region2: #{transformer_forward.10} parent=0 // pred_check
    _
  $region3: #{transformer_forward.10} parent=0 // pred_check_branch
    %9 = sbr.rel (0) target = $region5
  $region4: #{transformer_forward.10} parent=0 // pred_region
    _
  $region5: #{transformer_forward.10} parent=0 // pred_fallthru
    _
  // Predicated region
  $region6: #{transformer_forward.10} parent=0 // pred_check
    _
  $region7: #{transformer_forward.10} parent=0 // pred_check_branch
    %11 = sbr.rel (0) target = $region9
  $region8: #{transformer_forward.10} parent=0 // pred_region
    _
  $region9: #{transformer_forward.10} parent=0 // pred_fallthru
    _
  // Predicated region
  $region10: #{transformer_forward.10} parent=0 // pred_check
    _
  $region11: #{transformer_forward.10} parent=0 // pred_check_branch
    %13 = sbr.rel (0) target = $region13
  $region12: #{transformer_forward.10} parent=0 // pred_region
    _
  $region13: #{transformer_forward.10} parent=0 // pred_fallthru
    _
  %p15 = scmp.eq.s32.totalorder 0, 0
  // Predicated region
  $region14: #{transformer_forward.10} parent=0 // pred_check
    %p16 = pneg %p15
  $region15: #{transformer_forward.10} parent=0 // pred_check_branch
    %18 = sbr.rel (%p16) target = $region17
  $region16: #{transformer_forward.10} parent=0 // pred_region
    %vm19 = vcmask 261120
    %20 = vst.msk [vmem:[#allocation2] sm:$0xff] %vm19, 0.0
    %21 = vst.msk [vmem:[#allocation2 + $0x8] sm:$0xff] %vm19, 0.0
  $region17: #{transformer_forward.10} parent=0 // pred_fallthru
    _
  %v22 = vld [vmem:[#allocation2] sm:$0xff]
  %v23 = vld [vmem:[#allocation2 + $0x8] sm:$0xff]
  %v24 = vld [vmem:[%s0] sm:$0xff]
  %v25 = vld [vmem:[%s0 + $0x8] sm:$0xff]
  %v26 = vpack.c.bf16 %v25, %v24
  %v27 = vld [vmem:[%s1] sm:$0xf]
  %v28 = vld [vmem:[%s1 + $0x4] sm:$0xf]
  %v31 = vunpack.c.l.b16 %v27
  %v32 = vunpack.c.l.b16 %v28
  %v33 = vpack.c.b16 %v32, %v31
  %vm35 = vcmask 130048
  %v37 = vsel %vm35, %v26, 0
  %39 = vmatprep.subr.bf16.mxu0 0
  %40 = vmatpush1.bf16.msra.mxu0 %v33
  %41 = vmatprep.subr.bf16.mxu0 0
  %42 = vmatpush1.bf16.msra.mxu0 0
  %43 = vmatprep.subr.bf16.mxu0 0
  %44 = vmatpush1.bf16.msra.mxu0 0
  %45 = vmatprep.subr.bf16.mxu0 0
  %46 = vmatpush1.bf16.msra.mxu0 0
  %47 = vmatprep.subr.bf16.mxu0 0
  %48 = vmatpush1.bf16.msra.mxu0 0
  %49 = vmatprep.subr.bf16.mxu0 0
  %50 = vmatpush1.bf16.msra.mxu0 0
  %51 = vmatprep.subr.bf16.mxu0 0
  %52 = vmatpush1.bf16.msra.mxu0 0
  %53 = vmatprep.subr.bf16.mxu0 0
  %54 = vmatpush1.bf16.msra.mxu0 0
  %55 = vmatprep.subr.bf16.mxu0 0
  %56 = vmatpush1.bf16.msra.mxu0 0
  %57 = vmatprep.subr.bf16.mxu0 0
  %58 = vmatpush1.bf16.msra.mxu0 0
  %59 = vmatprep.subr.bf16.mxu0 0
  %60 = vmatpush1.bf16.msra.mxu0 0
  %61 = vmatprep.subr.bf16.mxu0 0
  %62 = vmatpush1.bf16.msra.mxu0 0
  %63 = vmatprep.subr.bf16.mxu0 0
  %64 = vmatpush1.bf16.msra.mxu0 0
  %65 = vmatprep.subr.bf16.mxu0 0
  %66 = vmatpush1.bf16.msra.mxu0 0
  %67 = vmatprep.subr.bf16.mxu0 0
  %68 = vmatpush1.bf16.msra.mxu0 0
  %69 = vmatprep.subr.bf16.mxu0 0
  %70 = vmatpush1.bf16.msra.mxu0 0
  %71 = vmatprep.mubr.bf16.mxu0 0
  %72 = vmatmul.mubr.bf16.gmra.mrb[0].mxu0 %v37
  %v73 = vpop.f32.mrb[0].mxu0
  %v74 = vadd.f32 0.0, %v73
  %v75 = vpop.f32.mrb[0].mxu0
  %v76 = vpop.f32.mrb[0].mxu0
  %v77 = vadd.f32 0.0, %v76
  %v78 = vpop.f32.mrb[0].mxu0
  %79 = vdwg.mxu0
  %v80 = vadd.f32 %v22, %v74
  %v81 = vadd.f32 %v23, %v77
  %vm82 = vcmask 261120
  %83 = vst.msk [vmem:[#allocation2] sm:$0xff] %vm82, %v80
  %84 = vst.msk [vmem:[#allocation2 + $0x8] sm:$0xff] %vm82, %v81
  // Predicated region
  $region18: #{transformer_forward.10} parent=0 // pred_check
    %p85 = pneg %p15
  $region19: #{transformer_forward.10} parent=0 // pred_check_branch
    %87 = sbr.rel (%p85) target = $region21
  $region20: #{transformer_forward.10} parent=0 // pred_region
    %v88 = vld [vmem:[#allocation2] sm:$0xff]
    %v89 = vld [vmem:[#allocation2 + $0x8] sm:$0xff]
    %v90 = vld [vmem:[%s2] sm:$0x1]
    %v92 = vlaneseq
    %v93 = vshrl.u32 %v92, 7
    %v94 = vsub.s32 0, %v93
    %v95 = vrot.slane %v90, %v94
    %v97 = vadd.f32 %v88, %v95
    %v98 = vadd.f32 %v89, %v95
    %99 = vst.msk [vmem:[%s3] sm:$0xff] %vm82, %v97
    %100 = vst.msk [vmem:[%s3 + $0x8] sm:$0xff] %vm82, %v98
  $region21: #{transformer_forward.10} parent=0 // pred_fallthru
    _
  // Predicated region
  $region22: #{transformer_forward.10} parent=0 // pred_check
    _
  $region23: #{transformer_forward.10} parent=0 // pred_check_branch
    %102 = sbr.rel (0) target = $region25
  $region24: #{transformer_forward.10} parent=0 // pred_region
    _
  $region25: #{transformer_forward.10} parent=0 // pred_fallthru
    _
  // Predicated region
  $region26: #{transformer_forward.10} parent=0 // pred_check
    _
  $region27: #{transformer_forward.10} parent=0 // pred_check_branch
    %104 = sbr.rel (0) target = $region29
  $region28: #{transformer_forward.10} parent=0 // pred_region
    _
  $region29: #{transformer_forward.10} parent=0 // pred_fallthru
    _

// kernel: transformer_forward.11
$region0: #{transformer_forward.11}
  #allocation0 [shape = 'u32[]', space=smem, size = 0x4, offset = 0x4, fixed_abs, tag = 'smem constant byte address 0x4 - core index']
  #allocation1 [shape = 'u32[144,128]{1,0:T(1,128)}', space=vmem, size = 0x12000, scoped, tag = 'internal scratch']
  #allocation2 [shape = 'f32[16,96]{1,0:T(8,128)}', space=vmem, size = 0x2000, scoped, tag = 'scratch operand']
  %s0 = inlined_call_operand.vmem [shape: f32[16,32], index: 0, kind: input, shape index: {}]
  %s1 = inlined_call_operand.vmem [shape: bf16[32,96], index: 1, kind: input, shape index: {}]
  %s2 = inlined_call_operand.vmem [shape: f32[1,96], index: 2, kind: input, shape index: {}]
  %s3 = inlined_call_operand.vmem [shape: f32[16,96], index: 3, kind: output, shape index: {}]
  %s4 = sld [smem:[#allocation0]]
  $region30: #{transformer_forward.11} parent=0
    _
  %s6 = ssub.s32 1, %s4
  %s7 = scalar_select 0, %s6, %s4
  // Predicated region
  $region2: #{transformer_forward.11} parent=0 // pred_check
    _
  $region3: #{transformer_forward.11} parent=0 // pred_check_branch
    %9 = sbr.rel (0) target = $region5
  $region4: #{transformer_forward.11} parent=0 // pred_region
    _
  $region5: #{transformer_forward.11} parent=0 // pred_fallthru
    _
  // Predicated region
  $region6: #{transformer_forward.11} parent=0 // pred_check
    _
  $region7: #{transformer_forward.11} parent=0 // pred_check_branch
    %11 = sbr.rel (0) target = $region9
  $region8: #{transformer_forward.11} parent=0 // pred_region
    _
  $region9: #{transformer_forward.11} parent=0 // pred_fallthru
    _
  // Predicated region
  $region10: #{transformer_forward.11} parent=0 // pred_check
    _
  $region11: #{transformer_forward.11} parent=0 // pred_check_branch
    %13 = sbr.rel (0) target = $region13
  $region12: #{transformer_forward.11} parent=0 // pred_region
    _
  $region13: #{transformer_forward.11} parent=0 // pred_fallthru
    _
  %p15 = scmp.eq.s32.totalorder 0, 0
  // Predicated region
  $region14: #{transformer_forward.11} parent=0 // pred_check
    %p16 = pneg %p15
  $region15: #{transformer_forward.11} parent=0 // pred_check_branch
    %18 = sbr.rel (%p16) target = $region17
  $region16: #{transformer_forward.11} parent=0 // pred_region
    %vm19 = vcmask 785408
    %20 = vst.msk [vmem:[#allocation2] sm:$0xff] %vm19, 0.0
    %21 = vst.msk [vmem:[#allocation2 + $0x8] sm:$0xff] %vm19, 0.0
  $region17: #{transformer_forward.11} parent=0 // pred_fallthru
    _
  %v22 = vld [vmem:[#allocation2] sm:$0xff]
  %v23 = vld [vmem:[#allocation2 + $0x8] sm:$0xff]
  %v24 = vld [vmem:[%s0] sm:$0xff]
  %v25 = vld [vmem:[%s0 + $0x8] sm:$0xff]
  %v26 = vpack.c.bf16 %v25, %v24
  %v27 = vld [vmem:[%s1] sm:$0xf]
  %v28 = vld [vmem:[%s1 + $0x4] sm:$0xf]
  %v29 = vld [vmem:[%s1 + $0x8] sm:$0xf]
  %v30 = vld [vmem:[%s1 + $0xc] sm:$0xf]
  %v35 = vunpack.c.l.b16 %v27
  %v36 = vunpack.c.l.b16 %v28
  %v37 = vunpack.c.l.b16 %v29
  %v38 = vunpack.c.l.b16 %v30
  %v39 = vpack.c.b16 %v36, %v35
  %v40 = vpack.c.b16 %v38, %v37
  %vm43 = vcmask 261120
  %v45 = vsel %vm43, %v26, 0
  %47 = vmatprep.subr.bf16.mxu0 0
  %48 = vmatpush1.bf16.msra.mxu0 %v39
  %49 = vmatprep.subr.bf16.mxu0 0
  %50 = vmatpush1.bf16.msra.mxu0 %v40
  %51 = vmatprep.subr.bf16.mxu0 0
  %52 = vmatpush1.bf16.msra.mxu0 0
  %53 = vmatprep.subr.bf16.mxu0 0
  %54 = vmatpush1.bf16.msra.mxu0 0
  %55 = vmatprep.subr.bf16.mxu0 0
  %56 = vmatpush1.bf16.msra.mxu0 0
  %57 = vmatprep.subr.bf16.mxu0 0
  %58 = vmatpush1.bf16.msra.mxu0 0
  %59 = vmatprep.subr.bf16.mxu0 0
  %60 = vmatpush1.bf16.msra.mxu0 0
  %61 = vmatprep.subr.bf16.mxu0 0
  %62 = vmatpush1.bf16.msra.mxu0 0
  %63 = vmatprep.subr.bf16.mxu0 0
  %64 = vmatpush1.bf16.msra.mxu0 0
  %65 = vmatprep.subr.bf16.mxu0 0
  %66 = vmatpush1.bf16.msra.mxu0 0
  %67 = vmatprep.subr.bf16.mxu0 0
  %68 = vmatpush1.bf16.msra.mxu0 0
  %69 = vmatprep.subr.bf16.mxu0 0
  %70 = vmatpush1.bf16.msra.mxu0 0
  %71 = vmatprep.subr.bf16.mxu0 0
  %72 = vmatpush1.bf16.msra.mxu0 0
  %73 = vmatprep.subr.bf16.mxu0 0
  %74 = vmatpush1.bf16.msra.mxu0 0
  %75 = vmatprep.subr.bf16.mxu0 0
  %76 = vmatpush1.bf16.msra.mxu0 0
  %77 = vmatprep.subr.bf16.mxu0 0
  %78 = vmatpush1.bf16.msra.mxu0 0
  %79 = vmatprep.mubr.bf16.mxu0 0
  %80 = vmatmul.mubr.bf16.gmra.mrb[0].mxu0 %v45
  %v81 = vpop.f32.mrb[0].mxu0
  %v82 = vadd.f32 0.0, %v81
  %v83 = vpop.f32.mrb[0].mxu0
  %v84 = vpop.f32.mrb[0].mxu0
  %v85 = vadd.f32 0.0, %v84
  %v86 = vpop.f32.mrb[0].mxu0
  %87 = vdwg.mxu0
  %v88 = vadd.f32 %v22, %v82
  %v89 = vadd.f32 %v23, %v85
  %vm90 = vcmask 785408
  %91 = vst.msk [vmem:[#allocation2] sm:$0xff] %vm90, %v88
  %92 = vst.msk [vmem:[#allocation2 + $0x8] sm:$0xff] %vm90, %v89
  // Predicated region
  $region18: #{transformer_forward.11} parent=0 // pred_check
    %p93 = pneg %p15
  $region19: #{transformer_forward.11} parent=0 // pred_check_branch
    %95 = sbr.rel (%p93) target = $region21
  $region20: #{transformer_forward.11} parent=0 // pred_region
    %v96 = vld [vmem:[#allocation2] sm:$0xff]
    %v97 = vld [vmem:[#allocation2 + $0x8] sm:$0xff]
    %v98 = vld [vmem:[%s2] sm:$0x1]
    %v100 = vlaneseq
    %v101 = vshrl.u32 %v100, 7
    %v102 = vsub.s32 0, %v101
    %v103 = vrot.slane %v98, %v102
    %v105 = vadd.f32 %v96, %v103
    %v106 = vadd.f32 %v97, %v103
    %107 = vst.msk [vmem:[%s3] sm:$0xff] %vm90, %v105
    %108 = vst.msk [vmem:[%s3 + $0x8] sm:$0xff] %vm90, %v106
  $region21: #{transformer_forward.11} parent=0 // pred_fallthru
    _
  // Predicated region
  $region22: #{transformer_forward.11} parent=0 // pred_check
    _
  $region23: #{transformer_forward.11} parent=0 // pred_check_branch
    %110 = sbr.rel (0) target = $region25
  $region24: #{transformer_forward.11} parent=0 // pred_region
    _
  $region25: #{transformer_forward.11} parent=0 // pred_fallthru
    _
  // Predicated region
  $region26: #{transformer_forward.11} parent=0 // pred_check
    _
  $region27: #{transformer_forward.11} parent=0 // pred_check_branch
    %112 = sbr.rel (0) target = $region29
  $region28: #{transformer_forward.11} parent=0 // pred_region
    _
  $region29: #{transformer_forward.11} parent=0 // pred_fallthru
    _

// kernel: transformer_forward.12
$region0: #{transformer_forward.12}
  #allocation0 [shape = 'u32[]', space=smem, size = 0x4, offset = 0x4, fixed_abs, tag = 'smem constant byte address 0x4 - core index']
  #allocation1 [shape = 'u32[144,128]{1,0:T(1,128)}', space=vmem, size = 0x12000, scoped, tag = 'internal scratch']
  %s0 = inlined_call_operand.vmem [shape: f32[2,8,96], index: 0, kind: input, shape index: {}, may-alias: {0,1}]
  %s1 = inlined_call_operand.vmem [shape: f32[2,8,96], index: 1, kind: input, shape index: {}, may-alias: {0,1}]
  %s2 = inlined_call_operand.vmem [shape: f32[2,8,32], index: 2, kind: output, shape index: {}]
  %s3 = sld [smem:[#allocation0]]
  $region41: #{transformer_forward.12} parent=0
    _
  %s5 = ssub.s32 1, %s3
  %s6 = scalar_select 0, %s5, %s3
  loop: start=0, step=1, limit=4
  $region2: #{transformer_forward.12} parent=0 // loop_pre_header
    _
  $region3: #{transformer_forward.12} parent=0 // loop_header
    %s8 = sphi 0, %s12
    %p9 = scmp.ge.s32.totalorder %s8, 4
    %s15 = sphi 0, %s27
    %s16 = sphi 0, %s23
    %s17 = sphi 0, %s15
    %s18 = sphi 0, %s16
    %s19 = sphi 0, %s17
    %s20 = sphi 0, %s18
    %s32 = sphi 0, %s34
    %s35 = sphi 0, %s32
    %s36 = sphi 0, %s35
    %s52 = sphi 0, %s36
    %s58 = sphi 0, %s60
    %s61 = sphi 0, %s58
    %s62 = sphi 0, %s61
    %s78 = sphi 0, %s62
    %s86 = sphi 0, %s88
    %s89 = sphi 0, %s86
    %s90 = sphi 0, %s89
    %s106 = sphi 0, %s90
  $region4: #{transformer_forward.12} parent=0 // loop_header_branch
    %11 = sbr.rel (%p9) target = $region8
  $region5: #{transformer_forward.12} parent=0 // loop_body
    %s13 = ssub.s32 %s8, 1
    %s14 = ssub.s32 %s8, 2
    %s21 = sadd.s32 1, %s16
    %p22 = scmp.ge.s32.totalorder %s21, 1
    %s23 = scalar_select %p22, 0, %s21
    %s24 = sadd.s32 1, %s15
    %s25 = scalar_select %p22, %s24, %s15
    %p26 = scmp.ge.s32.totalorder %s25, 2
    %s27 = scalar_select %p26, 0, %s25
    %s28 = ssub.s32 %s15, %s27
    %s29 = ssub.s32 %s16, %s23
    %s30 = sor.u32 %s28, %s29
    %p31 = scmp.eq.s32.totalorder %s30, 0
    %s33 = sadd.s32 %s32, 1
    %s34 = scalar_select %p31, %s32, %s33
    %p37 = pneg %p31
    %p38 = scmp.eq.s32.totalorder %s8, 1
    %p39 = por %p37, %p38
    %p40 = scmp.ne.s32.totalorder %s32, %s35
    %p41 = scmp.eq.s32.totalorder %s8, 0
    %p42 = por %p40, %p41
    %p43 = scmp.ne.s32.totalorder %s32, %s35
    %p44 = scmp.eq.s32.totalorder %s13, 1
    %p45 = por %p43, %p44
    %p46 = scmp.ne.s32.totalorder %s35, %s36
    %p47 = scmp.eq.s32.totalorder %s13, 0
    %p48 = por %p46, %p47
    %p49 = scmp.ne.s32.totalorder %s35, %s36
    %p50 = scmp.eq.s32.totalorder %s14, 1
    %p51 = por %p49, %p50
    %p53 = scmp.ne.s32.totalorder %s36, %s52
    %p54 = scmp.eq.s32.totalorder %s14, 0
    %p55 = por %p53, %p54
    %s56 = ssub.s32 %s15, %s27
    %p57 = scmp.eq.s32.totalorder %s56, 0
    %s59 = sadd.s32 %s58, 1
    %s60 = scalar_select %p57, %s58, %s59
    %p63 = pneg %p57
    %p64 = scmp.eq.s32.totalorder %s8, 1
    %p65 = por %p63, %p64
    %p66 = scmp.ne.s32.totalorder %s58, %s61
    %p67 = scmp.eq.s32.totalorder %s8, 0
    %p68 = por %p66, %p67
    %p69 = scmp.ne.s32.totalorder %s58, %s61
    %p70 = scmp.eq.s32.totalorder %s13, 1
    %p71 = por %p69, %p70
    %p72 = scmp.ne.s32.totalorder %s61, %s62
    %p73 = scmp.eq.s32.totalorder %s13, 0
    %p74 = por %p72, %p73
    %p75 = scmp.ne.s32.totalorder %s61, %s62
    %p76 = scmp.eq.s32.totalorder %s14, 1
    %p77 = por %p75, %p76
    %p79 = scmp.ne.s32.totalorder %s62, %s78
    %p80 = scmp.eq.s32.totalorder %s14, 0
    %p81 = por %p79, %p80
    %s82 = ssub.s32 %s15, %s27
    %s83 = ssub.s32 %s16, %s23
    %s84 = sor.u32 %s82, %s83
    %p85 = scmp.eq.s32.totalorder %s84, 0
    %s87 = sadd.s32 %s86, 1
    %s88 = scalar_select %p85, %s86, %s87
    %p91 = pneg %p85
    %p92 = scmp.eq.s32.totalorder %s8, 1
    %p93 = por %p91, %p92
    %p94 = scmp.ne.s32.totalorder %s86, %s89
    %p95 = scmp.eq.s32.totalorder %s8, 0
    %p96 = por %p94, %p95
    %p97 = scmp.ne.s32.totalorder %s86, %s89
    %p98 = scmp.eq.s32.totalorder %s13, 1
    %p99 = por %p97, %p98
    %p100 = scmp.ne.s32.totalorder %s89, %s90
    %p101 = scmp.eq.s32.totalorder %s13, 0
    %p102 = por %p100, %p101
    %p103 = scmp.ne.s32.totalorder %s89, %s90
    %p104 = scmp.eq.s32.totalorder %s14, 1
    %p105 = por %p103, %p104
    %p107 = scmp.ne.s32.totalorder %s90, %s106
    %p108 = scmp.eq.s32.totalorder %s14, 0
    %p109 = por %p107, %p108
    %p110 = scmp.le.s32.totalorder 1, %s8
    %p111 = scmp.lt.s32.totalorder %s8, 3
    %p112 = pnand %p110, %p111
    %p113 = pneg %p112
    // Predicated region
    $region9: #{transformer_forward.12} parent=5 // pred_check
      _
    $region10: #{transformer_forward.12} parent=5 // pred_check_branch
      %115 = sbr.rel (%p112) target = $region12
    $region11: #{transformer_forward.12} parent=5 // pred_region
      %s116 = ssub.s32 %s8, 1
    $region12: #{transformer_forward.12} parent=5 // pred_fallthru
      _
    %p117 = scmp.lt.s32.totalorder %s8, 2
    // Predicated region
    $region13: #{transformer_forward.12} parent=5 // pred_check
      %p118 = pneg %p117
    $region14: #{transformer_forward.12} parent=5 // pred_check_branch
      %120 = sbr.rel (%p118) target = $region16
    $region15: #{transformer_forward.12} parent=5 // pred_region
      // Predicated region
      $region17: #{transformer_forward.12} parent=15 // pred_check
        %p121 = pneg %p42
      $region18: #{transformer_forward.12} parent=15 // pred_check_branch
        %123 = sbr.rel (%p121) target = $region20
      $region19: #{transformer_forward.12} parent=15 // pred_region
        %p124 = scmp.lt.s32.totalorder %s15, 1
        %s125 = scalar_select %p124, %s15, 1
        %p126 = scmp.lt.s32.totalorder %s16, 0
        %s127 = scalar_select %p126, %s16, 0
        %s128 = sadd.s32 %s127, %s125
        %s129 = smul.addr %s128, 8
        %s130 = scalar_lea.vmem %s0, %s129
      $region20: #{transformer_forward.12} parent=15 // pred_fallthru
        _
      // Predicated region
      $region21: #{transformer_forward.12} parent=15 // pred_check
        %p131 = pneg %p68
      $region22: #{transformer_forward.12} parent=15 // pred_check_branch
        %133 = sbr.rel (%p131) target = $region24
      $region23: #{transformer_forward.12} parent=15 // pred_region
        %p134 = scmp.lt.s32.totalorder %s15, 1
        %s135 = scalar_select %p134, %s15, 1
        %s136 = smul.addr %s135, 8
        %s137 = scalar_lea.vmem %s1, %s136
      $region24: #{transformer_forward.12} parent=15 // pred_fallthru
        _
    $region16: #{transformer_forward.12} parent=5 // pred_fallthru
      _
    %p138 = scmp.le.s32.totalorder 1, %s8
    %p139 = scmp.lt.s32.totalorder %s8, 3
    %p140 = pnand %p138, %p139
    %p141 = pneg %p140
    // Predicated region
    $region25: #{transformer_forward.12} parent=5 // pred_check
      _
    $region26: #{transformer_forward.12} parent=5 // pred_check_branch
      %143 = sbr.rel (%p140) target = $region28
    $region27: #{transformer_forward.12} parent=5 // pred_region
      %s144 = ssub.s32 %s8, 1
      %p145 = scmp.lt.s32.totalorder %s17, 1
      %s146 = scalar_select %p145, %s17, 1
      %p147 = scmp.lt.s32.totalorder %s18, 0
      %s148 = scalar_select %p147, %s18, 0
      %s149 = sadd.s32 %s148, %s146
      %s150 = smul.addr %s149, 8
      %s151 = scalar_lea.vmem %s0, %s150
      %p152 = pneg %p48
      %p153 = pneg %p45
      %p154 = scmp.lt.s32.totalorder %s17, 1
      %s155 = scalar_select %p154, %s17, 1
      %s156 = smul.addr %s155, 8
      %s157 = scalar_lea.vmem %s1, %s156
      %p158 = pneg %p74
      %p159 = pneg %p71
      %p160 = pneg %p102
      %p161 = pneg %p99
      %p162 = scmp.lt.s32.totalorder %s17, 1
      %s163 = scalar_select %p162, %s17, 1
      %p164 = scmp.lt.s32.totalorder %s18, 0
      %s165 = scalar_select %p164, %s18, 0
      %s166 = sadd.s32 %s165, %s163
      %s167 = smul.addr %s166, 8
      %s168 = scalar_lea.vmem %s2, %s167
      %p169 = scmp.lt.s32.totalorder %s17, 1
      %s170 = scalar_select %p169, %s17, 1
      %p171 = scmp.lt.s32.totalorder %s18, 0
      %s172 = scalar_select %p171, %s18, 0
      %s173 = sadd.s32 %s172, %s170
      %s174 = smul.addr %s173, 8
      %s175 = scalar_lea.vmem %s0, %s174
      %p176 = scmp.lt.s32.totalorder %s17, 1
      %s177 = scalar_select %p176, %s17, 1
      %s178 = smul.addr %s177, 8
      %s179 = scalar_lea.vmem %s1, %s178
      %p180 = scmp.lt.s32.totalorder %s17, 1
      %s181 = scalar_select %p180, %s17, 1
      %p182 = scmp.lt.s32.totalorder %s18, 0
      %s183 = scalar_select %p182, %s18, 0
      %s184 = sadd.s32 %s183, %s181
      %s185 = smul.addr %s184, 8
      %s186 = scalar_lea.vmem %s2, %s185
      %v188 = vld [vmem:[%s175] sm:$0xff]
      %v189 = vld [vmem:[%s179] sm:$0xff]
      %v190 = vpack.c.bf16 %v188, %v188
      %v191 = vpack.c.bf16 %v189, %v189
      %193 = vrot.lane.b32.xlu0 %v191, 96
      %v194 = vpop.permute.xlu0 %193
      %vm195 = vcmask 64512
      %v197 = vsel %vm195, %v190, 0
      %v200 = vsel %vm195, %v194, 0
      %202 = vmatprep.subr.bf16.mxu0 0
      %203 = vmatpush1.bf16.xpose.msra.mxu0 %v200
      %204 = vmatprep.subr.bf16.mxu0 0
      %205 = vmatpush1.bf16.xpose.msra.mxu0 0
      %206 = vmatprep.subr.bf16.mxu0 0
      %207 = vmatpush1.bf16.xpose.msra.mxu0 0
      %208 = vmatprep.subr.bf16.mxu0 0
      %209 = vmatpush1.bf16.xpose.msra.mxu0 0
      %210 = vmatprep.subr.bf16.mxu0 0
      %211 = vmatpush1.bf16.xpose.msra.mxu0 0
      %212 = vmatprep.subr.bf16.mxu0 0
      %213 = vmatpush1.bf16.xpose.msra.mxu0 0
      %214 = vmatprep.subr.bf16.mxu0 0
      %215 = vmatpush1.bf16.xpose.msra.mxu0 0
      %216 = vmatprep.subr.bf16.mxu0 0
      %217 = vmatpush1.bf16.xpose.msra.mxu0 0
      %218 = vmatprep.subr.bf16.mxu0 0
      %219 = vmatpush1.bf16.xpose.msra.mxu0 0
      %220 = vmatprep.subr.bf16.mxu0 0
      %221 = vmatpush1.bf16.xpose.msra.mxu0 0
      %222 = vmatprep.subr.bf16.mxu0 0
      %223 = vmatpush1.bf16.xpose.msra.mxu0 0
      %224 = vmatprep.subr.bf16.mxu0 0
      %225 = vmatpush1.bf16.xpose.msra.mxu0 0
      %226 = vmatprep.subr.bf16.mxu0 0
      %227 = vmatpush1.bf16.xpose.msra.mxu0 0
      %228 = vmatprep.subr.bf16.mxu0 0
      %229 = vmatpush1.bf16.xpose.msra.mxu0 0
      %230 = vmatprep.subr.bf16.mxu0 0
      %231 = vmatpush1.bf16.xpose.msra.mxu0 0
      %232 = vmatprep.subr.bf16.mxu0 0
      %233 = vmatpush1.bf16.xpose.msra.mxu0 0
      %234 = vmatprep.mubr.bf16.mxu0 0
      %235 = vmatmul.mubr.bf16.gmra.mrb[0].mxu0 %v197
      %v236 = vpop.f32.mrb[0].mxu0
      %v237 = vadd.f32 0.0, %v236
      %v238 = vpop.f32.mrb[0].mxu0
      %v239 = vpop.f32.mrb[0].mxu0
      %v240 = vpop.f32.mrb[0].mxu0
      %241 = vdwg.mxu0
      %v242 = vmul.f32 %v237, 0.35355338
      %v243 = vsel %vm195, %v242, -inf
      %244 = vmax.xlane.f32.xlu0 %v243
      %v245 = vpop.xlane.xlu0 %244
      %v246 = vsub.f32 %v242, %v245
      %v247 = vmul.f32 %v246, 1.442695
      %v248 = vpow.pop %v247
      %v249 = vsel %vm195, %v248, 0.0
      %250 = vadd.xlane.f32.xlu0 %v249
      %v251 = vpop.xlane.xlu0 %250
      %v252 = vrcp.pop %v251
      %v253 = vmul.f32 %v248, %v252
      %v254 = vpack.c.bf16 %v253, %v253
      %255 = vrot.lane.b32.xlu0 %v191, 64
      %v256 = vpop.permute.xlu0 %255
      %v258 = vsel %vm195, %v254, 0
      %vm260 = vcmask 1043456
      %v262 = vsel %vm260, %v256, 0
      %264 = vmatprep.subr.bf16.mxu0 0
      %265 = vmatpush1.bf16.msra.mxu0 %v262
      %266 = vmatprep.subr.bf16.mxu0 0
      %267 = vmatpush1.bf16.msra.mxu0 0
      %268 = vmatprep.subr.bf16.mxu0 0
      %269 = vmatpush1.bf16.msra.mxu0 0
      %270 = vmatprep.subr.bf16.mxu0 0
      %271 = vmatpush1.bf16.msra.mxu0 0
      %272 = vmatprep.subr.bf16.mxu0 0
      %273 = vmatpush1.bf16.msra.mxu0 0
      %274 = vmatprep.subr.bf16.mxu0 0
      %275 = vmatpush1.bf16.msra.mxu0 0
      %276 = vmatprep.subr.bf16.mxu0 0
      %277 = vmatpush1.bf16.msra.mxu0 0
      %278 = vmatprep.subr.bf16.mxu0 0
      %279 = vmatpush1.bf16.msra.mxu0 0
      %280 = vmatprep.subr.bf16.mxu0 0
      %281 = vmatpush1.bf16.msra.mxu0 0
      %282 = vmatprep.subr.bf16.mxu0 0
      %283 = vmatpush1.bf16.msra.mxu0 0
      %284 = vmatprep.subr.bf16.mxu0 0
      %285 = vmatpush1.bf16.msra.mxu0 0
      %286 = vmatprep.subr.bf16.mxu0 0
      %287 = vmatpush1.bf16.msra.mxu0 0
      %288 = vmatprep.subr.bf16.mxu0 0
      %289 = vmatpush1.bf16.msra.mxu0 0
      %290 = vmatprep.subr.bf16.mxu0 0
      %291 = vmatpush1.bf16.msra.mxu0 0
      %292 = vmatprep.subr.bf16.mxu0 0
      %293 = vmatpush1.bf16.msra.mxu0 0
      %294 = vmatprep.subr.bf16.mxu0 0
      %295 = vmatpush1.bf16.msra.mxu0 0
      %296 = vmatprep.mubr.bf16.mxu0 0
      %297 = vmatmul.mubr.bf16.gmra.mrb[0].mxu0 %v258
      %v298 = vpop.f32.mrb[0].mxu0
      %v299 = vadd.f32 0.0, %v298
      %v300 = vpop.f32.mrb[0].mxu0
      %v301 = vpop.f32.mrb[0].mxu0
      %v302 = vpop.f32.mrb[0].mxu0
      %303 = vdwg.mxu0
      %305 = vrot.lane.b32.xlu0 %v190, 120
      %v306 = vpop.permute.xlu0 %305
      %307 = vrot.lane.b32.xlu0 %v191, 88
      %v308 = vpop.permute.xlu0 %307
      %v310 = vsel %vm195, %v306, 0
      %v313 = vsel %vm195, %v308, 0
      %315 = vmatprep.subr.bf16.mxu0 0
      %316 = vmatpush1.bf16.xpose.msra.mxu0 %v313
      %317 = vmatprep.subr.bf16.mxu0 0
      %318 = vmatpush1.bf16.xpose.msra.mxu0 0
      %319 = vmatprep.subr.bf16.mxu0 0
      %320 = vmatpush1.bf16.xpose.msra.mxu0 0
      %321 = vmatprep.subr.bf16.mxu0 0
      %322 = vmatpush1.bf16.xpose.msra.mxu0 0
      %323 = vmatprep.subr.bf16.mxu0 0
      %324 = vmatpush1.bf16.xpose.msra.mxu0 0
      %325 = vmatprep.subr.bf16.mxu0 0
      %326 = vmatpush1.bf16.xpose.msra.mxu0 0
      %327 = vmatprep.subr.bf16.mxu0 0
      %328 = vmatpush1.bf16.xpose.msra.mxu0 0
      %329 = vmatprep.subr.bf16.mxu0 0
      %330 = vmatpush1.bf16.xpose.msra.mxu0 0
      %331 = vmatprep.subr.bf16.mxu0 0
      %332 = vmatpush1.bf16.xpose.msra.mxu0 0
      %333 = vmatprep.subr.bf16.mxu0 0
      %334 = vmatpush1.bf16.xpose.msra.mxu0 0
      %335 = vmatprep.subr.bf16.mxu0 0
      %336 = vmatpush1.bf16.xpose.msra.mxu0 0
      %337 = vmatprep.subr.bf16.mxu0 0
      %338 = vmatpush1.bf16.xpose.msra.mxu0 0
      %339 = vmatprep.subr.bf16.mxu0 0
      %340 = vmatpush1.bf16.xpose.msra.mxu0 0
      %341 = vmatprep.subr.bf16.mxu0 0
      %342 = vmatpush1.bf16.xpose.msra.mxu0 0
      %343 = vmatprep.subr.bf16.mxu0 0
      %344 = vmatpush1.bf16.xpose.msra.mxu0 0
      %345 = vmatprep.subr.bf16.mxu0 0
      %346 = vmatpush1.bf16.xpose.msra.mxu0 0
      %347 = vmatprep.mubr.bf16.mxu0 0
      %348 = vmatmul.mubr.bf16.gmra.mrb[0].mxu0 %v310
      %v349 = vpop.f32.mrb[0].mxu0
      %v350 = vadd.f32 0.0, %v349
      %v351 = vpop.f32.mrb[0].mxu0
      %v352 = vpop.f32.mrb[0].mxu0
      %v353 = vpop.f32.mrb[0].mxu0
      %354 = vdwg.mxu0
      %v355 = vmul.f32 %v350, 0.35355338
      %v356 = vsel %vm195, %v355, -inf
      %357 = vmax.xlane.f32.xlu0 %v356
      %v358 = vpop.xlane.xlu0 %357
      %v359 = vsub.f32 %v355, %v358
      %v360 = vmul.f32 %v359, 1.442695
      %v361 = vpow.pop %v360
      %v362 = vsel %vm195, %v361, 0.0
      %363 = vadd.xlane.f32.xlu0 %v362
      %v364 = vpop.xlane.xlu0 %363
      %v365 = vrcp.pop %v364
      %v366 = vmul.f32 %v361, %v365
      %v367 = vpack.c.bf16 %v366, %v366
      %368 = vrot.lane.b32.xlu0 %v191, 56
      %v369 = vpop.permute.xlu0 %368
      %v371 = vsel %vm195, %v367, 0
      %v374 = vsel %vm260, %v369, 0
      %376 = vmatprep.subr.bf16.mxu0 0
      %377 = vmatpush1.bf16.msra.mxu0 %v374
      %378 = vmatprep.subr.bf16.mxu0 0
      %379 = vmatpush1.bf16.msra.mxu0 0
      %380 = vmatprep.subr.bf16.mxu0 0
      %381 = vmatpush1.bf16.msra.mxu0 0
      %382 = vmatprep.subr.bf16.mxu0 0
      %383 = vmatpush1.bf16.msra.mxu0 0
      %384 = vmatprep.subr.bf16.mxu0 0
      %385 = vmatpush1.bf16.msra.mxu0 0
      %386 = vmatprep.subr.bf16.mxu0 0
      %387 = vmatpush1.bf16.msra.mxu0 0
      %388 = vmatprep.subr.bf16.mxu0 0
      %389 = vmatpush1.bf16.msra.mxu0 0
      %390 = vmatprep.subr.bf16.mxu0 0
      %391 = vmatpush1.bf16.msra.mxu0 0
      %392 = vmatprep.subr.bf16.mxu0 0
      %393 = vmatpush1.bf16.msra.mxu0 0
      %394 = vmatprep.subr.bf16.mxu0 0
      %395 = vmatpush1.bf16.msra.mxu0 0
      %396 = vmatprep.subr.bf16.mxu0 0
      %397 = vmatpush1.bf16.msra.mxu0 0
      %398 = vmatprep.subr.bf16.mxu0 0
      %399 = vmatpush1.bf16.msra.mxu0 0
      %400 = vmatprep.subr.bf16.mxu0 0
      %401 = vmatpush1.bf16.msra.mxu0 0
      %402 = vmatprep.subr.bf16.mxu0 0
      %403 = vmatpush1.bf16.msra.mxu0 0
      %404 = vmatprep.subr.bf16.mxu0 0
      %405 = vmatpush1.bf16.msra.mxu0 0
      %406 = vmatprep.subr.bf16.mxu0 0
      %407 = vmatpush1.bf16.msra.mxu0 0
      %408 = vmatprep.mubr.bf16.mxu0 0
      %409 = vmatmul.mubr.bf16.gmra.mrb[0].mxu0 %v371
      %v410 = vpop.f32.mrb[0].mxu0
      %v411 = vadd.f32 0.0, %v410
      %v412 = vpop.f32.mrb[0].mxu0
      %v413 = vpop.f32.mrb[0].mxu0
      %v414 = vpop.f32.mrb[0].mxu0
      %415 = vdwg.mxu0
      %416 = vrot.lane.b32.xlu0 %v190, 112
      %v417 = vpop.permute.xlu0 %416
      %418 = vrot.lane.b32.xlu0 %v191, 80
      %v419 = vpop.permute.xlu0 %418
      %v421 = vsel %vm195, %v417, 0
      %v424 = vsel %vm195, %v419, 0
      %426 = vmatprep.subr.bf16.mxu0 0
      %427 = vmatpush1.bf16.xpose.msra.mxu0 %v424
      %428 = vmatprep.subr.bf16.mxu0 0
      %429 = vmatpush1.bf16.xpose.msra.mxu0 0
      %430 = vmatprep.subr.bf16.mxu0 0
      %431 = vmatpush1.bf16.xpose.msra.mxu0 0
      %432 = vmatprep.subr.bf16.mxu0 0
      %433 = vmatpush1.bf16.xpose.msra.mxu0 0
      %434 = vmatprep.subr.bf16.mxu0 0
      %435 = vmatpush1.bf16.xpose.msra.mxu0 0
      %436 = vmatprep.subr.bf16.mxu0 0
      %437 = vmatpush1.bf16.xpose.msra.mxu0 0
      %438 = vmatprep.subr.bf16.mxu0 0
      %439 = vmatpush1.bf16.xpose.msra.mxu0 0
      %440 = vmatprep.subr.bf16.mxu0 0
      %441 = vmatpush1.bf16.xpose.msra.mxu0 0
      %442 = vmatprep.subr.bf16.mxu0 0
      %443 = vmatpush1.bf16.xpose.msra.mxu0 0
      %444 = vmatprep.subr.bf16.mxu0 0
      %445 = vmatpush1.bf16.xpose.msra.mxu0 0
      %446 = vmatprep.subr.bf16.mxu0 0
      %447 = vmatpush1.bf16.xpose.msra.mxu0 0
      %448 = vmatprep.subr.bf16.mxu0 0
      %449 = vmatpush1.bf16.xpose.msra.mxu0 0
      %450 = vmatprep.subr.bf16.mxu0 0
      %451 = vmatpush1.bf16.xpose.msra.mxu0 0
      %452 = vmatprep.subr.bf16.mxu0 0
      %453 = vmatpush1.bf16.xpose.msra.mxu0 0
      %454 = vmatprep.subr.bf16.mxu0 0
      %455 = vmatpush1.bf16.xpose.msra.mxu0 0
      %456 = vmatprep.subr.bf16.mxu0 0
      %457 = vmatpush1.bf16.xpose.msra.mxu0 0
      %458 = vmatprep.mubr.bf16.mxu0 0
      %459 = vmatmul.mubr.bf16.gmra.mrb[0].mxu0 %v421
      %v460 = vpop.f32.mrb[0].mxu0
      %v461 = vadd.f32 0.0, %v460
      %v462 = vpop.f32.mrb[0].mxu0
      %v463 = vpop.f32.mrb[0].mxu0
      %v464 = vpop.f32.mrb[0].mxu0
      %465 = vdwg.mxu0
      %v466 = vmul.f32 %v461, 0.35355338
      %v467 = vsel %vm195, %v466, -inf
      %468 = vmax.xlane.f32.xlu0 %v467
      %v469 = vpop.xlane.xlu0 %468
      %v470 = vsub.f32 %v466, %v469
      %v471 = vmul.f32 %v470, 1.442695
      %v472 = vpow.pop %v471
      %v473 = vsel %vm195, %v472, 0.0
      %474 = vadd.xlane.f32.xlu0 %v473
      %v475 = vpop.xlane.xlu0 %474
      %v476 = vrcp.pop %v475
      %v477 = vmul.f32 %v472, %v476
      %v478 = vpack.c.bf16 %v477, %v477
      %479 = vrot.lane.b32.xlu0 %v191, 48
      %v480 = vpop.permute.xlu0 %479
      %v482 = vsel %vm195, %v478, 0
      %v485 = vsel %vm260, %v480, 0
      %487 = vmatprep.subr.bf16.mxu0 0
      %488 = vmatpush1.bf16.msra.mxu0 %v485
      %489 = vmatprep.subr.bf16.mxu0 0
      %490 = vmatpush1.bf16.msra.mxu0 0
      %491 = vmatprep.subr.bf16.mxu0 0
      %492 = vmatpush1.bf16.msra.mxu0 0
      %493 = vmatprep.subr.bf16.mxu0 0
      %494 = vmatpush1.bf16.msra.mxu0 0
      %495 = vmatprep.subr.bf16.mxu0 0
      %496 = vmatpush1.bf16.msra.mxu0 0
      %497 = vmatprep.subr.bf16.mxu0 0
      %498 = vmatpush1.bf16.msra.mxu0 0
      %499 = vmatprep.subr.bf16.mxu0 0
      %500 = vmatpush1.bf16.msra.mxu0 0
      %501 = vmatprep.subr.bf16.mxu0 0
      %502 = vmatpush1.bf16.msra.mxu0 0
      %503 = vmatprep.subr.bf16.mxu0 0
      %504 = vmatpush1.bf16.msra.mxu0 0
      %505 = vmatprep.subr.bf16.mxu0 0
      %506 = vmatpush1.bf16.msra.mxu0 0
      %507 = vmatprep.subr.bf16.mxu0 0
      %508 = vmatpush1.bf16.msra.mxu0 0
      %509 = vmatprep.subr.bf16.mxu0 0
      %510 = vmatpush1.bf16.msra.mxu0 0
      %511 = vmatprep.subr.bf16.mxu0 0
      %512 = vmatpush1.bf16.msra.mxu0 0
      %513 = vmatprep.subr.bf16.mxu0 0
      %514 = vmatpush1.bf16.msra.mxu0 0
      %515 = vmatprep.subr.bf16.mxu0 0
      %516 = vmatpush1.bf16.msra.mxu0 0
      %517 = vmatprep.subr.bf16.mxu0 0
      %518 = vmatpush1.bf16.msra.mxu0 0
      %519 = vmatprep.mubr.bf16.mxu0 0
      %520 = vmatmul.mubr.bf16.gmra.mrb[0].mxu0 %v482
      %v521 = vpop.f32.mrb[0].mxu0
      %v522 = vadd.f32 0.0, %v521
      %v523 = vpop.f32.mrb[0].mxu0
      %v524 = vpop.f32.mrb[0].mxu0
      %v525 = vpop.f32.mrb[0].mxu0
      %526 = vdwg.mxu0
      %527 = vrot.lane.b32.xlu0 %v190, 104
      %v528 = vpop.permute.xlu0 %527
      %529 = vrot.lane.b32.xlu0 %v191, 72
      %v530 = vpop.permute.xlu0 %529
      %v532 = vsel %vm195, %v528, 0
      %v535 = vsel %vm195, %v530, 0
      %537 = vmatprep.subr.bf16.mxu0 0
      %538 = vmatpush1.bf16.xpose.msra.mxu0 %v535
      %539 = vmatprep.subr.bf16.mxu0 0
      %540 = vmatpush1.bf16.xpose.msra.mxu0 0
      %541 = vmatprep.subr.bf16.mxu0 0
      %542 = vmatpush1.bf16.xpose.msra.mxu0 0
      %543 = vmatprep.subr.bf16.mxu0 0
      %544 = vmatpush1.bf16.xpose.msra.mxu0 0
      %545 = vmatprep.subr.bf16.mxu0 0
      %546 = vmatpush1.bf16.xpose.msra.mxu0 0
      %547 = vmatprep.subr.bf16.mxu0 0
      %548 = vmatpush1.bf16.xpose.msra.mxu0 0
      %549 = vmatprep.subr.bf16.mxu0 0
      %550 = vmatpush1.bf16.xpose.msra.mxu0 0
      %551 = vmatprep.subr.bf16.mxu0 0
      %552 = vmatpush1.bf16.xpose.msra.mxu0 0
      %553 = vmatprep.subr.bf16.mxu0 0
      %554 = vmatpush1.bf16.xpose.msra.mxu0 0
      %555 = vmatprep.subr.bf16.mxu0 0
      %556 = vmatpush1.bf16.xpose.msra.mxu0 0
      %557 = vmatprep.subr.bf16.mxu0 0
      %558 = vmatpush1.bf16.xpose.msra.mxu0 0
      %559 = vmatprep.subr.bf16.mxu0 0
      %560 = vmatpush1.bf16.xpose.msra.mxu0 0
      %561 = vmatprep.subr.bf16.mxu0 0
      %562 = vmatpush1.bf16.xpose.msra.mxu0 0
      %563 = vmatprep.subr.bf16.mxu0 0
      %564 = vmatpush1.bf16.xpose.msra.mxu0 0
      %565 = vmatprep.subr.bf16.mxu0 0
      %566 = vmatpush1.bf16.xpose.msra.mxu0 0
      %567 = vmatprep.subr.bf16.mxu0 0
      %568 = vmatpush1.bf16.xpose.msra.mxu0 0
      %569 = vmatprep.mubr.bf16.mxu0 0
      %570 = vmatmul.mubr.bf16.gmra.mrb[0].mxu0 %v532
      %v571 = vpop.f32.mrb[0].mxu0
      %v572 = vadd.f32 0.0, %v571
      %v573 = vpop.f32.mrb[0].mxu0
      %v574 = vpop.f32.mrb[0].mxu0
      %v575 = vpop.f32.mrb[0].mxu0
      %576 = vdwg.mxu0
      %v577 = vmul.f32 %v572, 0.35355338
      %v578 = vsel %vm195, %v577, -inf
      %579 = vmax.xlane.f32.xlu0 %v578
      %v580 = vpop.xlane.xlu0 %579
      %v581 = vsub.f32 %v577, %v580
      %v582 = vmul.f32 %v581, 1.442695
      %v583 = vpow.pop %v582
      %v584 = vsel %vm195, %v583, 0.0
      %585 = vadd.xlane.f32.xlu0 %v584
      %v586 = vpop.xlane.xlu0 %585
      %v587 = vrcp.pop %v586
      %v588 = vmul.f32 %v583, %v587
      %v589 = vpack.c.bf16 %v588, %v588
      %590 = vrot.lane.b32.xlu0 %v191, 40
      %v591 = vpop.permute.xlu0 %590
      %v593 = vsel %vm195, %v589, 0
      %v596 = vsel %vm260, %v591, 0
      %598 = vmatprep.subr.bf16.mxu0 0
      %599 = vmatpush1.bf16.msra.mxu0 %v596
      %600 = vmatprep.subr.bf16.mxu0 0
      %601 = vmatpush1.bf16.msra.mxu0 0
      %602 = vmatprep.subr.bf16.mxu0 0
      %603 = vmatpush1.bf16.msra.mxu0 0
      %604 = vmatprep.subr.bf16.mxu0 0
      %605 = vmatpush1.bf16.msra.mxu0 0
      %606 = vmatprep.subr.bf16.mxu0 0
      %607 = vmatpush1.bf16.msra.mxu0 0
      %608 = vmatprep.subr.bf16.mxu0 0
      %609 = vmatpush1.bf16.msra.mxu0 0
      %610 = vmatprep.subr.bf16.mxu0 0
      %611 = vmatpush1.bf16.msra.mxu0 0
      %612 = vmatprep.subr.bf16.mxu0 0
      %613 = vmatpush1.bf16.msra.mxu0 0
      %614 = vmatprep.subr.bf16.mxu0 0
      %615 = vmatpush1.bf16.msra.mxu0 0
      %616 = vmatprep.subr.bf16.mxu0 0
      %617 = vmatpush1.bf16.msra.mxu0 0
      %618 = vmatprep.subr.bf16.mxu0 0
      %619 = vmatpush1.bf16.msra.mxu0 0
      %620 = vmatprep.subr.bf16.mxu0 0
      %621 = vmatpush1.bf16.msra.mxu0 0
      %622 = vmatprep.subr.bf16.mxu0 0
      %623 = vmatpush1.bf16.msra.mxu0 0
      %624 = vmatprep.subr.bf16.mxu0 0
      %625 = vmatpush1.bf16.msra.mxu0 0
      %626 = vmatprep.subr.bf16.mxu0 0
      %627 = vmatpush1.bf16.msra.mxu0 0
      %628 = vmatprep.subr.bf16.mxu0 0
      %629 = vmatpush1.bf16.msra.mxu0 0
      %630 = vmatprep.mubr.bf16.mxu0 0
      %631 = vmatmul.mubr.bf16.gmra.mrb[0].mxu0 %v593
      %v632 = vpop.f32.mrb[0].mxu0
      %v633 = vadd.f32 0.0, %v632
      %v634 = vpop.f32.mrb[0].mxu0
      %v635 = vpop.f32.mrb[0].mxu0
      %v636 = vpop.f32.mrb[0].mxu0
      %637 = vdwg.mxu0
      %639 = vrot.lane.b32.xlu0 %v411, 8
      %v640 = vpop.permute.xlu0 %639
      %643 = vrot.lane.b32.xlu0 %v522, 16
      %v644 = vpop.permute.xlu0 %643
      %647 = vrot.lane.b32.xlu0 %v633, 24
      %v648 = vpop.permute.xlu0 %647
      %v650 = vsel %vm195, %v299, %v640
      %vm651 = vcmask 130048
      %v652 = vsel %vm651, %v650, %v644
      %vm653 = vcmask 195584
      %v654 = vsel %vm653, %v652, %v648
      %vm655 = vcmask 261120
      %656 = vst.msk [vmem:[%s186] sm:$0xff] %vm655, %v654
      %p657 = scmp.lt.s32.totalorder %s17, 1
      %s658 = scalar_select %p657, %s17, 1
      %p659 = scmp.lt.s32.totalorder %s18, 0
      %s660 = scalar_select %p659, %s18, 0
      %s661 = sadd.s32 %s660, %s658
      %s662 = smul.addr %s661, 8
      %s663 = scalar_lea.vmem %s2, %s662
      // Predicated region
      $region29: #{transformer_forward.12} parent=27 // pred_check
        %p664 = pneg %p99
      $region30: #{transformer_forward.12} parent=27 // pred_check_branch
        %666 = sbr.rel (%p664) target = $region32
      $region31: #{transformer_forward.12} parent=27 // pred_region
        _
      $region32: #{transformer_forward.12} parent=27 // pred_fallthru
        _
    $region28: #{transformer_forward.12} parent=5 // pred_fallthru
      _
    %p667 = scmp.le.s32.totalorder 2, %s8
    // Predicated region
    $region33: #{transformer_forward.12} parent=5 // pred_check
      %p668 = pneg %p667
    $region34: #{transformer_forward.12} parent=5 // pred_check_branch
      %670 = sbr.rel (%p668) target = $region36
    $region35: #{transformer_forward.12} parent=5 // pred_region
      %s671 = ssub.s32 %s8, 2
      // Predicated region
      $region37: #{transformer_forward.12} parent=35 // pred_check
        %p672 = pneg %p105
      $region38: #{transformer_forward.12} parent=35 // pred_check_branch
        %674 = sbr.rel (%p672) target = $region40
      $region39: #{transformer_forward.12} parent=35 // pred_region
        %p675 = scmp.lt.s32.totalorder %s19, 1
        %s676 = scalar_select %p675, %s19, 1
        %p677 = scmp.lt.s32.totalorder %s20, 0
        %s678 = scalar_select %p677, %s20, 0
        %s679 = sadd.s32 %s678, %s676
        %s680 = smul.addr %s679, 8
        %s681 = scalar_lea.vmem %s2, %s680
      $region40: #{transformer_forward.12} parent=35 // pred_fallthru
        _
    $region36: #{transformer_forward.12} parent=5 // pred_fallthru
      _
  $region6: #{transformer_forward.12} parent=0 // loop_footer
    %s12 = sadd.s32 1, %s8
  $region7: #{transformer_forward.12} parent=0 // loop_footer_branch
    %7 = sbr.rel target = $region3
  $region8: #{transformer_forward.12} parent=0 // loop_exit
    _

// kernel: transformer_forward.13
$region0: #{transformer_forward.13}
  #allocation0 [shape = 'u32[]', space=smem, size = 0x4, offset = 0x4, fixed_abs, tag = 'smem constant byte address 0x4 - core index']
  #allocation1 [shape = 'u32[144,128]{1,0:T(1,128)}', space=vmem, size = 0x12000, scoped, tag = 'internal scratch']
  #allocation2 [shape = 'f32[16,32]{1,0:T(8,128)}', space=vmem, size = 0x2000, scoped, tag = 'scratch operand']
  %s0 = inlined_call_operand.vmem [shape: f32[16,32], index: 0, kind: input, shape index: {}]
  %s1 = inlined_call_operand.vmem [shape: bf16[32,32], index: 1, kind: input, shape index: {}]
  %s2 = inlined_call_operand.vmem [shape: f32[1,32], index: 2, kind: input, shape index: {}]
  %s3 = inlined_call_operand.vmem [shape: f32[16,32], index: 3, kind: input, shape index: {}]
  %s4 = inlined_call_operand.vmem [shape: f32[1,32], index: 4, kind: input, shape index: {}]
  %s5 = inlined_call_operand.vmem [shape: f32[1,32], index: 5, kind: input, shape index: {}]
  %s6 = inlined_call_operand.vmem [shape: f32[16,32], index: 6, kind: output, shape index: {}]
  %s7 = sld [smem:[#allocation0]]
  $region42: #{transformer_forward.13} parent=0
    _
  %s9 = ssub.s32 1, %s7
  %s10 = scalar_select 0, %s9, %s7
  // Predicated region
  $region2: #{transformer_forward.13} parent=0 // pred_check
    _
  $region3: #{transformer_forward.13} parent=0 // pred_check_branch
    %12 = sbr.rel (0) target = $region5
  $region4: #{transformer_forward.13} parent=0 // pred_region
    _
  $region5: #{transformer_forward.13} parent=0 // pred_fallthru
    _
  // Predicated region
  $region6: #{transformer_forward.13} parent=0 // pred_check
    _
  $region7: #{transformer_forward.13} parent=0 // pred_check_branch
    %14 = sbr.rel (0) target = $region9
  $region8: #{transformer_forward.13} parent=0 // pred_region
    _
  $region9: #{transformer_forward.13} parent=0 // pred_fallthru
    _
  // Predicated region
  $region10: #{transformer_forward.13} parent=0 // pred_check
    _
  $region11: #{transformer_forward.13} parent=0 // pred_check_branch
    %16 = sbr.rel (0) target = $region13
  $region12: #{transformer_forward.13} parent=0 // pred_region
    _
  $region13: #{transformer_forward.13} parent=0 // pred_fallthru
    _
  // Predicated region
  $region14: #{transformer_forward.13} parent=0 // pred_check
    _
  $region15: #{transformer_forward.13} parent=0 // pred_check_branch
    %18 = sbr.rel (0) target = $region17
  $region16: #{transformer_forward.13} parent=0 // pred_region
    _
  $region17: #{transformer_forward.13} parent=0 // pred_fallthru
    _
  // Predicated region
  $region18: #{transformer_forward.13} parent=0 // pred_check
    _
  $region19: #{transformer_forward.13} parent=0 // pred_check_branch
    %20 = sbr.rel (0) target = $region21
  $region20: #{transformer_forward.13} parent=0 // pred_region
    _
  $region21: #{transformer_forward.13} parent=0 // pred_fallthru
    _
  // Predicated region
  $region22: #{transformer_forward.13} parent=0 // pred_check
    _
  $region23: #{transformer_forward.13} parent=0 // pred_check_branch
    %22 = sbr.rel (0) target = $region25
  $region24: #{transformer_forward.13} parent=0 // pred_region
    _
  $region25: #{transformer_forward.13} parent=0 // pred_fallthru
    _
  %p24 = scmp.eq.s32.totalorder 0, 0
  // Predicated region
  $region26: #{transformer_forward.13} parent=0 // pred_check
    %p25 = pneg %p24
  $region27: #{transformer_forward.13} parent=0 // pred_check_branch
    %27 = sbr.rel (%p25) target = $region29
  $region28: #{transformer_forward.13} parent=0 // pred_region
    %vm28 = vcmask 261120
    %29 = vst.msk [vmem:[#allocation2] sm:$0xff] %vm28, 0.0
    %30 = vst.msk [vmem:[#allocation2 + $0x8] sm:$0xff] %vm28, 0.0
  $region29: #{transformer_forward.13} parent=0 // pred_fallthru
    _
  %v31 = vld [vmem:[#allocation2] sm:$0xff]
  %v32 = vld [vmem:[#allocation2 + $0x8] sm:$0xff]
  %v33 = vld [vmem:[%s0] sm:$0xff]
  %v34 = vld [vmem:[%s0 + $0x8] sm:$0xff]
  %v35 = vpack.c.bf16 %v34, %v33
  %v36 = vld [vmem:[%s1] sm:$0xf]
  %v37 = vld [vmem:[%s1 + $0x4] sm:$0xf]
  %v38 = vld [vmem:[%s1 + $0x8] sm:$0xf]
  %v39 = vld [vmem:[%s1 + $0xc] sm:$0xf]
  %v44 = vunpack.c.l.b16 %v36
  %v45 = vunpack.c.l.b16 %v37
  %v46 = vunpack.c.l.b16 %v38
  %v47 = vunpack.c.l.b16 %v39
  %v48 = vpack.c.b16 %v45, %v44
  %v49 = vpack.c.b16 %v47, %v46
  %vm52 = vcmask 261120
  %v54 = vsel %vm52, %v35, 0
  %56 = vmatprep.subr.bf16.mxu0 0
  %57 = vmatpush1.bf16.msra.mxu0 %v48
  %58 = vmatprep.subr.bf16.mxu0 0
  %59 = vmatpush1.bf16.msra.mxu0 %v49
  %60 = vmatprep.subr.bf16.mxu0 0
  %61 = vmatpush1.bf16.msra.mxu0 0
  %62 = vmatprep.subr.bf16.mxu0 0
  %63 = vmatpush1.bf16.msra.mxu0 0
  %64 = vmatprep.subr.bf16.mxu0 0
  %65 = vmatpush1.bf16.msra.mxu0 0
  %66 = vmatprep.subr.bf16.mxu0 0
  %67 = vmatpush1.bf16.msra.mxu0 0
  %68 = vmatprep.subr.bf16.mxu0 0
  %69 = vmatpush1.bf16.msra.mxu0 0
  %70 = vmatprep.subr.bf16.mxu0 0
  %71 = vmatpush1.bf16.msra.mxu0 0
  %72 = vmatprep.subr.bf16.mxu0 0
  %73 = vmatpush1.bf16.msra.mxu0 0
  %74 = vmatprep.subr.bf16.mxu0 0
  %75 = vmatpush1.bf16.msra.mxu0 0
  %76 = vmatprep.subr.bf16.mxu0 0
  %77 = vmatpush1.bf16.msra.mxu0 0
  %78 = vmatprep.subr.bf16.mxu0 0
  %79 = vmatpush1.bf16.msra.mxu0 0
  %80 = vmatprep.subr.bf16.mxu0 0
  %81 = vmatpush1.bf16.msra.mxu0 0
  %82 = vmatprep.subr.bf16.mxu0 0
  %83 = vmatpush1.bf16.msra.mxu0 0
  %84 = vmatprep.subr.bf16.mxu0 0
  %85 = vmatpush1.bf16.msra.mxu0 0
  %86 = vmatprep.subr.bf16.mxu0 0
  %87 = vmatpush1.bf16.msra.mxu0 0
  %88 = vmatprep.mubr.bf16.mxu0 0
  %89 = vmatmul.mubr.bf16.gmra.mrb[0].mxu0 %v54
  %v90 = vpop.f32.mrb[0].mxu0
  %v91 = vadd.f32 0.0, %v90
  %v92 = vpop.f32.mrb[0].mxu0
  %v93 = vpop.f32.mrb[0].mxu0
  %v94 = vadd.f32 0.0, %v93
  %v95 = vpop.f32.mrb[0].mxu0
  %96 = vdwg.mxu0
  %v97 = vadd.f32 %v31, %v91
  %v98 = vadd.f32 %v32, %v94
  %99 = vst.msk [vmem:[#allocation2] sm:$0xff] %vm52, %v97
  %100 = vst.msk [vmem:[#allocation2 + $0x8] sm:$0xff] %vm52, %v98
  // Predicated region
  $region30: #{transformer_forward.13} parent=0 // pred_check
    %p101 = pneg %p24
  $region31: #{transformer_forward.13} parent=0 // pred_check_branch
    %103 = sbr.rel (%p101) target = $region33
  $region32: #{transformer_forward.13} parent=0 // pred_region
    %v104 = vld [vmem:[#allocation2] sm:$0xff]
    %v105 = vld [vmem:[#allocation2 + $0x8] sm:$0xff]
    %v106 = vld [vmem:[%s2] sm:$0x1]
    %v108 = vlaneseq
    %v109 = vshrl.u32 %v108, 7
    %v110 = vsub.s32 0, %v109
    %v111 = vrot.slane %v106, %v110
    %v113 = vadd.f32 %v104, %v111
    %v114 = vadd.f32 %v105, %v111
    %v115 = vld [vmem:[%s3] sm:$0xff]
    %v116 = vld [vmem:[%s3 + $0x8] sm:$0xff]
    %v117 = vadd.f32 %v113, %v115
    %v118 = vadd.f32 %v114, %v116
    %v119 = vsel %vm52, %v117, 0.0
    %120 = vadd.xlane.f32.xlu0 %v119
    %v121 = vpop.xlane.xlu0 %120
    %v122 = vsel %vm52, %v118, 0.0
    %123 = vadd.xlane.f32.xlu0 %v122
    %v124 = vpop.xlane.xlu0 %123
    %v125 = vrcp.pop 32.0
    %v126 = vmul.f32 %v121, %v125
    %v127 = vmul.f32 %v124, %v125
    %v128 = vsub.f32 %v117, %v126
    %v129 = vsub.f32 %v118, %v127
    %v130 = vmul.f32 %v128, %v128
    %v131 = vmul.f32 %v129, %v129
    %v132 = vsel %vm52, %v130, 0.0
    %133 = vadd.xlane.f32.xlu0 %v132
    %v134 = vpop.xlane.xlu0 %133
    %v135 = vsel %vm52, %v131, 0.0
    %136 = vadd.xlane.f32.xlu0 %v135
    %v137 = vpop.xlane.xlu0 %136
    %v138 = vmul.f32 %v134, %v125
    %v139 = vmul.f32 %v137, %v125
    %v140 = vadd.f32 %v138, 1e-05
    %v141 = vadd.f32 %v139, 1e-05
    %v142 = vrsqrt.pop %v140
    %v143 = vrsqrt.pop %v141
    %v144 = vmul.f32 %v128, %v142
    %v145 = vmul.f32 %v129, %v143
    %v146 = vld [vmem:[%s4] sm:$0x1]
    %v148 = vlaneseq
    %v149 = vshrl.u32 %v148, 7
    %v150 = vsub.s32 0, %v149
    %v151 = vrot.slane %v146, %v150
    %v153 = vmul.f32 %v144, %v151
    %v154 = vmul.f32 %v145, %v151
    %v155 = vld [vmem:[%s5] sm:$0x1]
    %v157 = vlaneseq
    %v158 = vshrl.u32 %v157, 7
    %v159 = vsub.s32 0, %v158
    %v160 = vrot.slane %v155, %v159
    %v162 = vadd.f32 %v153, %v160
    %v163 = vadd.f32 %v154, %v160
    %164 = vst.msk [vmem:[%s6] sm:$0xff] %vm52, %v162
    %165 = vst.msk [vmem:[%s6 + $0x8] sm:$0xff] %vm52, %v163
  $region33: #{transformer_forward.13} parent=0 // pred_fallthru
    _
  // Predicated region
  $region34: #{transformer_forward.13} parent=0 // pred_check
    _
  $region35: #{transformer_forward.13} parent=0 // pred_check_branch
    %167 = sbr.rel (0) target = $region37
  $region36: #{transformer_forward.13} parent=0 // pred_region
    _
  $region37: #{transformer_forward.13} parent=0 // pred_fallthru
    _
  // Predicated region
  $region38: #{transformer_forward.13} parent=0 // pred_check
    _
  $region39: #{transformer_forward.13} parent=0 // pred_check_branch
    %169 = sbr.rel (0) target = $region41
  $region40: #{transformer_forward.13} parent=0 // pred_region
    _
  $region41: #{transformer_forward.13} parent=0 // pred_fallthru
    _

// kernel: transformer_forward.19
$region0: #{transformer_forward.19}
  #allocation0 [shape = 'u32[]', space=smem, size = 0x4, offset = 0x4, fixed_abs, tag = 'smem constant byte address 0x4 - core index']
  #allocation1 [shape = 'u32[144,128]{1,0:T(1,128)}', space=vmem, size = 0x12000, scoped, tag = 'internal scratch']
  #allocation2 [shape = 'f32[16,8]{1,0:T(8,128)}', space=vmem, size = 0x2000, scoped, tag = 'scratch operand']
  %s0 = inlined_call_operand.vmem [shape: f32[16,32], index: 0, kind: input, shape index: {}]
  %s1 = inlined_call_operand.vmem [shape: bf16[32,8], index: 1, kind: input, shape index: {}]
  %s2 = inlined_call_operand.vmem [shape: f32[1,8], index: 2, kind: input, shape index: {}]
  %s3 = inlined_call_operand.vmem [shape: f32[16,8], index: 3, kind: output, shape index: {}]
  %s4 = sld [smem:[#allocation0]]
  $region30: #{transformer_forward.19} parent=0
    _
  %s6 = ssub.s32 1, %s4
  %s7 = scalar_select 0, %s6, %s4
  // Predicated region
  $region2: #{transformer_forward.19} parent=0 // pred_check
    _
  $region3: #{transformer_forward.19} parent=0 // pred_check_branch
    %9 = sbr.rel (0) target = $region5
  $region4: #{transformer_forward.19} parent=0 // pred_region
    _
  $region5: #{transformer_forward.19} parent=0 // pred_fallthru
    _
  // Predicated region
  $region6: #{transformer_forward.19} parent=0 // pred_check
    _
  $region7: #{transformer_forward.19} parent=0 // pred_check_branch
    %11 = sbr.rel (0) target = $region9
  $region8: #{transformer_forward.19} parent=0 // pred_region
    _
  $region9: #{transformer_forward.19} parent=0 // pred_fallthru
    _
  // Predicated region
  $region10: #{transformer_forward.19} parent=0 // pred_check
    _
  $region11: #{transformer_forward.19} parent=0 // pred_check_branch
    %13 = sbr.rel (0) target = $region13
  $region12: #{transformer_forward.19} parent=0 // pred_region
    _
  $region13: #{transformer_forward.19} parent=0 // pred_fallthru
    _
  %p15 = scmp.eq.s32.totalorder 0, 0
  // Predicated region
  $region14: #{transformer_forward.19} parent=0 // pred_check
    %p16 = pneg %p15
  $region15: #{transformer_forward.19} parent=0 // pred_check_branch
    %18 = sbr.rel (%p16) target = $region17
  $region16: #{transformer_forward.19} parent=0 // pred_region
    %vm19 = vcmask 64512
    %20 = vst.msk [vmem:[#allocation2] sm:$0xff] %vm19, 0.0
    %21 = vst.msk [vmem:[#allocation2 + $0x8] sm:$0xff] %vm19, 0.0
  $region17: #{transformer_forward.19} parent=0 // pred_fallthru
    _
  %v22 = vld [vmem:[#allocation2] sm:$0xff]
  %v23 = vld [vmem:[#allocation2 + $0x8] sm:$0xff]
  %v24 = vld [vmem:[%s0] sm:$0xff]
  %v25 = vld [vmem:[%s0 + $0x8] sm:$0xff]
  %v26 = vpack.c.bf16 %v25, %v24
  %v27 = vld [vmem:[%s1] sm:$0xf]
  %v28 = vld [vmem:[%s1 + $0x4] sm:$0xf]
  %v29 = vld [vmem:[%s1 + $0x8] sm:$0xf]
  %v30 = vld [vmem:[%s1 + $0xc] sm:$0xf]
  %v35 = vunpack.c.l.b16 %v27
  %v36 = vunpack.c.l.b16 %v28
  %v37 = vunpack.c.l.b16 %v29
  %v38 = vunpack.c.l.b16 %v30
  %v39 = vpack.c.b16 %v36, %v35
  %v40 = vpack.c.b16 %v38, %v37
  %vm43 = vcmask 261120
  %v45 = vsel %vm43, %v26, 0
  %47 = vmatprep.subr.bf16.mxu0 0
  %48 = vmatpush1.bf16.msra.mxu0 %v39
  %49 = vmatprep.subr.bf16.mxu0 0
  %50 = vmatpush1.bf16.msra.mxu0 %v40
  %51 = vmatprep.subr.bf16.mxu0 0
  %52 = vmatpush1.bf16.msra.mxu0 0
  %53 = vmatprep.subr.bf16.mxu0 0
  %54 = vmatpush1.bf16.msra.mxu0 0
  %55 = vmatprep.subr.bf16.mxu0 0
  %56 = vmatpush1.bf16.msra.mxu0 0
  %57 = vmatprep.subr.bf16.mxu0 0
  %58 = vmatpush1.bf16.msra.mxu0 0
  %59 = vmatprep.subr.bf16.mxu0 0
  %60 = vmatpush1.bf16.msra.mxu0 0
  %61 = vmatprep.subr.bf16.mxu0 0
  %62 = vmatpush1.bf16.msra.mxu0 0
  %63 = vmatprep.subr.bf16.mxu0 0
  %64 = vmatpush1.bf16.msra.mxu0 0
  %65 = vmatprep.subr.bf16.mxu0 0
  %66 = vmatpush1.bf16.msra.mxu0 0
  %67 = vmatprep.subr.bf16.mxu0 0
  %68 = vmatpush1.bf16.msra.mxu0 0
  %69 = vmatprep.subr.bf16.mxu0 0
  %70 = vmatpush1.bf16.msra.mxu0 0
  %71 = vmatprep.subr.bf16.mxu0 0
  %72 = vmatpush1.bf16.msra.mxu0 0
  %73 = vmatprep.subr.bf16.mxu0 0
  %74 = vmatpush1.bf16.msra.mxu0 0
  %75 = vmatprep.subr.bf16.mxu0 0
  %76 = vmatpush1.bf16.msra.mxu0 0
  %77 = vmatprep.subr.bf16.mxu0 0
  %78 = vmatpush1.bf16.msra.mxu0 0
  %79 = vmatprep.mubr.bf16.mxu0 0
  %80 = vmatmul.mubr.bf16.gmra.mrb[0].mxu0 %v45
  %v81 = vpop.f32.mrb[0].mxu0
  %v82 = vadd.f32 0.0, %v81
  %v83 = vpop.f32.mrb[0].mxu0
  %v84 = vpop.f32.mrb[0].mxu0
  %v85 = vadd.f32 0.0, %v84
  %v86 = vpop.f32.mrb[0].mxu0
  %87 = vdwg.mxu0
  %v88 = vadd.f32 %v22, %v82
  %v89 = vadd.f32 %v23, %v85
  %vm90 = vcmask 64512
  %91 = vst.msk [vmem:[#allocation2] sm:$0xff] %vm90, %v88
  %92 = vst.msk [vmem:[#allocation2 + $0x8] sm:$0xff] %vm90, %v89
  // Predicated region
  $region18: #{transformer_forward.19} parent=0 // pred_check
    %p93 = pneg %p15
  $region19: #{transformer_forward.19} parent=0 // pred_check_branch
    %95 = sbr.rel (%p93) target = $region21
  $region20: #{transformer_forward.19} parent=0 // pred_region
    %v96 = vld [vmem:[#allocation2] sm:$0xff]
    %v97 = vld [vmem:[#allocation2 + $0x8] sm:$0xff]
    %v98 = vld [vmem:[%s2] sm:$0x1]
    %v100 = vlaneseq
    %v101 = vshrl.u32 %v100, 7
    %v102 = vsub.s32 0, %v101
    %v103 = vrot.slane %v98, %v102
    %v105 = vadd.f32 %v96, %v103
    %v106 = vadd.f32 %v97, %v103
    %107 = vst.msk [vmem:[%s3] sm:$0xff] %vm90, %v105
    %108 = vst.msk [vmem:[%s3 + $0x8] sm:$0xff] %vm90, %v106
  $region21: #{transformer_forward.19} parent=0 // pred_fallthru
    _
  // Predicated region
  $region22: #{transformer_forward.19} parent=0 // pred_check
    _
  $region23: #{transformer_forward.19} parent=0 // pred_check_branch
    %110 = sbr.rel (0) target = $region25
  $region24: #{transformer_forward.19} parent=0 // pred_region
    _
  $region25: #{transformer_forward.19} parent=0 // pred_fallthru
    _
  // Predicated region
  $region26: #{transformer_forward.19} parent=0 // pred_check
    _
  $region27: #{transformer_forward.19} parent=0 // pred_check_branch
    %112 = sbr.rel (0) target = $region29
  $region28: #{transformer_forward.19} parent=0 // pred_region
    _
  $region29: #{transformer_forward.19} parent=0 // pred_fallthru
    _

// kernel: transformer_forward.14
$region0: #{transformer_forward.14}
  #allocation0 [shape = 'u32[]', space=smem, size = 0x4, offset = 0x4, fixed_abs, tag = 'smem constant byte address 0x4 - core index']
  #allocation1 [shape = 'u32[144,128]{1,0:T(1,128)}', space=vmem, size = 0x12000, scoped, tag = 'internal scratch']
  %s0 = inlined_call_operand.vmem [shape: f32[16,32], index: 0, kind: input, shape index: {}, may-alias: {0,5}]
  %s1 = inlined_call_operand.vmem [shape: bf16[32,32], index: 1, kind: input, shape index: {}]
  %s2 = inlined_call_operand.vmem [shape: f32[1,32], index: 2, kind: input, shape index: {}]
  %s3 = inlined_call_operand.vmem [shape: bf16[32,32], index: 3, kind: input, shape index: {}]
  %s4 = inlined_call_operand.vmem [shape: f32[1,32], index: 4, kind: input, shape index: {}]
  %s5 = inlined_call_operand.vmem [shape: f32[16,32], index: 5, kind: input, shape index: {}, may-alias: {0,5}]
  %s6 = inlined_call_operand.vmem [shape: f32[1,32], index: 6, kind: input, shape index: {}]
  %s7 = inlined_call_operand.vmem [shape: f32[1,32], index: 7, kind: input, shape index: {}]
  %s8 = inlined_call_operand.vmem [shape: f32[16,32], index: 8, kind: output, shape index: {}]
  %s9 = sld [smem:[#allocation0]]
  $region42: #{transformer_forward.14} parent=0
    _
  %s11 = ssub.s32 1, %s9
  %s12 = scalar_select 0, %s11, %s9
  // Predicated region
  $region2: #{transformer_forward.14} parent=0 // pred_check
    _
  $region3: #{transformer_forward.14} parent=0 // pred_check_branch
    %14 = sbr.rel (0) target = $region5
  $region4: #{transformer_forward.14} parent=0 // pred_region
    _
  $region5: #{transformer_forward.14} parent=0 // pred_fallthru
    _
  // Predicated region
  $region6: #{transformer_forward.14} parent=0 // pred_check
    _
  $region7: #{transformer_forward.14} parent=0 // pred_check_branch
    %16 = sbr.rel (0) target = $region9
  $region8: #{transformer_forward.14} parent=0 // pred_region
    _
  $region9: #{transformer_forward.14} parent=0 // pred_fallthru
    _
  // Predicated region
  $region10: #{transformer_forward.14} parent=0 // pred_check
    _
  $region11: #{transformer_forward.14} parent=0 // pred_check_branch
    %18 = sbr.rel (0) target = $region13
  $region12: #{transformer_forward.14} parent=0 // pred_region
    _
  $region13: #{transformer_forward.14} parent=0 // pred_fallthru
    _
  // Predicated region
  $region14: #{transformer_forward.14} parent=0 // pred_check
    _
  $region15: #{transformer_forward.14} parent=0 // pred_check_branch
    %20 = sbr.rel (0) target = $region17
  $region16: #{transformer_forward.14} parent=0 // pred_region
    _
  $region17: #{transformer_forward.14} parent=0 // pred_fallthru
    _
  // Predicated region
  $region18: #{transformer_forward.14} parent=0 // pred_check
    _
  $region19: #{transformer_forward.14} parent=0 // pred_check_branch
    %22 = sbr.rel (0) target = $region21
  $region20: #{transformer_forward.14} parent=0 // pred_region
    _
  $region21: #{transformer_forward.14} parent=0 // pred_fallthru
    _
  // Predicated region
  $region22: #{transformer_forward.14} parent=0 // pred_check
    _
  $region23: #{transformer_forward.14} parent=0 // pred_check_branch
    %24 = sbr.rel (0) target = $region25
  $region24: #{transformer_forward.14} parent=0 // pred_region
    _
  $region25: #{transformer_forward.14} parent=0 // pred_fallthru
    _
  // Predicated region
  $region26: #{transformer_forward.14} parent=0 // pred_check
    _
  $region27: #{transformer_forward.14} parent=0 // pred_check_branch
    %26 = sbr.rel (0) target = $region29
  $region28: #{transformer_forward.14} parent=0 // pred_region
    _
  $region29: #{transformer_forward.14} parent=0 // pred_fallthru
    _
  // Predicated region
  $region30: #{transformer_forward.14} parent=0 // pred_check
    _
  $region31: #{transformer_forward.14} parent=0 // pred_check_branch
    %28 = sbr.rel (0) target = $region33
  $region32: #{transformer_forward.14} parent=0 // pred_region
    _
  $region33: #{transformer_forward.14} parent=0 // pred_fallthru
    _
  %v30 = vld [vmem:[%s0] sm:$0xff]
  %v31 = vld [vmem:[%s0 + $0x8] sm:$0xff]
  %v32 = vpack.c.bf16 %v31, %v30
  %v33 = vld [vmem:[%s1] sm:$0xf]
  %v34 = vld [vmem:[%s1 + $0x4] sm:$0xf]
  %v35 = vld [vmem:[%s1 + $0x8] sm:$0xf]
  %v36 = vld [vmem:[%s1 + $0xc] sm:$0xf]
  %v37 = vld [vmem:[%s2] sm:$0x1]
  %v39 = vlaneseq
  %v40 = vshrl.u32 %v39, 7
  %v41 = vsub.s32 0, %v40
  %v42 = vrot.slane %v37, %v41
  %v48 = vunpack.c.l.b16 %v33
  %v49 = vunpack.c.l.b16 %v34
  %v50 = vunpack.c.l.b16 %v35
  %v51 = vunpack.c.l.b16 %v36
  %v52 = vpack.c.b16 %v49, %v48
  %v53 = vpack.c.b16 %v51, %v50
  %vm56 = vcmask 261120
  %v58 = vsel %vm56, %v32, 0
  %60 = vmatprep.subr.bf16.mxu0 0
  %61 = vmatpush1.bf16.msra.mxu0 %v52
  %62 = vmatprep.subr.bf16.mxu0 0
  %63 = vmatpush1.bf16.msra.mxu0 %v53
  %64 = vmatprep.subr.bf16.mxu0 0
  %65 = vmatpush1.bf16.msra.mxu0 0
  %66 = vmatprep.subr.bf16.mxu0 0
  %67 = vmatpush1.bf16.msra.mxu0 0
  %68 = vmatprep.subr.bf16.mxu0 0
  %69 = vmatpush1.bf16.msra.mxu0 0
  %70 = vmatprep.subr.bf16.mxu0 0
  %71 = vmatpush1.bf16.msra.mxu0 0
  %72 = vmatprep.subr.bf16.mxu0 0
  %73 = vmatpush1.bf16.msra.mxu0 0
  %74 = vmatprep.subr.bf16.mxu0 0
  %75 = vmatpush1.bf16.msra.mxu0 0
  %76 = vmatprep.subr.bf16.mxu0 0
  %77 = vmatpush1.bf16.msra.mxu0 0
  %78 = vmatprep.subr.bf16.mxu0 0
  %79 = vmatpush1.bf16.msra.mxu0 0
  %80 = vmatprep.subr.bf16.mxu0 0
  %81 = vmatpush1.bf16.msra.mxu0 0
  %82 = vmatprep.subr.bf16.mxu0 0
  %83 = vmatpush1.bf16.msra.mxu0 0
  %84 = vmatprep.subr.bf16.mxu0 0
  %85 = vmatpush1.bf16.msra.mxu0 0
  %86 = vmatprep.subr.bf16.mxu0 0
  %87 = vmatpush1.bf16.msra.mxu0 0
  %88 = vmatprep.subr.bf16.mxu0 0
  %89 = vmatpush1.bf16.msra.mxu0 0
  %90 = vmatprep.subr.bf16.mxu0 0
  %91 = vmatpush1.bf16.msra.mxu0 0
  %92 = vmatprep.mubr.bf16.mxu0 0
  %93 = vmatmul.mubr.bf16.gmra.mrb[0].mxu0 %v58
  %v94 = vpop.f32.mrb[0].mxu0
  %v95 = vadd.f32 %v42, %v94
  %v96 = vpop.f32.mrb[0].mxu0
  %v97 = vpop.f32.mrb[0].mxu0
  %v98 = vadd.f32 %v42, %v97
  %v99 = vpop.f32.mrb[0].mxu0
  %100 = vdwg.mxu0
  %v101 = vmax.f32 %v95, 0.0
  %v102 = vmax.f32 %v98, 0.0
  %v103 = vpack.c.bf16 %v102, %v101
  %v104 = vld [vmem:[%s3] sm:$0xf]
  %v105 = vld [vmem:[%s3 + $0x4] sm:$0xf]
  %v106 = vld [vmem:[%s3 + $0x8] sm:$0xf]
  %v107 = vld [vmem:[%s3 + $0xc] sm:$0xf]
  %v108 = vld [vmem:[%s4] sm:$0x1]
  %v110 = vlaneseq
  %v111 = vshrl.u32 %v110, 7
  %v112 = vsub.s32 0, %v111
  %v113 = vrot.slane %v108, %v112
  %v119 = vunpack.c.l.b16 %v104
  %v120 = vunpack.c.l.b16 %v105
  %v121 = vunpack.c.l.b16 %v106
  %v122 = vunpack.c.l.b16 %v107
  %v123 = vpack.c.b16 %v120, %v119
  %v124 = vpack.c.b16 %v122, %v121
  %v128 = vsel %vm56, %v103, 0
  %130 = vmatprep.subr.bf16.mxu0 0
  %131 = vmatpush1.bf16.msra.mxu0 %v123
  %132 = vmatprep.subr.bf16.mxu0 0
  %133 = vmatpush1.bf16.msra.mxu0 %v124
  %134 = vmatprep.subr.bf16.mxu0 0
  %135 = vmatpush1.bf16.msra.mxu0 0
  %136 = vmatprep.subr.bf16.mxu0 0
  %137 = vmatpush1.bf16.msra.mxu0 0
  %138 = vmatprep.subr.bf16.mxu0 0
  %139 = vmatpush1.bf16.msra.mxu0 0
  %140 = vmatprep.subr.bf16.mxu0 0
  %141 = vmatpush1.bf16.msra.mxu0 0
  %142 = vmatprep.subr.bf16.mxu0 0
  %143 = vmatpush1.bf16.msra.mxu0 0
  %144 = vmatprep.subr.bf16.mxu0 0
  %145 = vmatpush1.bf16.msra.mxu0 0
  %146 = vmatprep.subr.bf16.mxu0 0
  %147 = vmatpush1.bf16.msra.mxu0 0
  %148 = vmatprep.subr.bf16.mxu0 0
  %149 = vmatpush1.bf16.msra.mxu0 0
  %150 = vmatprep.subr.bf16.mxu0 0
  %151 = vmatpush1.bf16.msra.mxu0 0
  %152 = vmatprep.subr.bf16.mxu0 0
  %153 = vmatpush1.bf16.msra.mxu0 0
  %154 = vmatprep.subr.bf16.mxu0 0
  %155 = vmatpush1.bf16.msra.mxu0 0
  %156 = vmatprep.subr.bf16.mxu0 0
  %157 = vmatpush1.bf16.msra.mxu0 0
  %158 = vmatprep.subr.bf16.mxu0 0
  %159 = vmatpush1.bf16.msra.mxu0 0
  %160 = vmatprep.subr.bf16.mxu0 0
  %161 = vmatpush1.bf16.msra.mxu0 0
  %162 = vmatprep.mubr.bf16.mxu0 0
  %163 = vmatmul.mubr.bf16.gmra.mrb[0].mxu0 %v128
  %v164 = vpop.f32.mrb[0].mxu0
  %v165 = vadd.f32 %v113, %v164
  %v166 = vpop.f32.mrb[0].mxu0
  %v167 = vpop.f32.mrb[0].mxu0
  %v168 = vadd.f32 %v113, %v167
  %v169 = vpop.f32.mrb[0].mxu0
  %170 = vdwg.mxu0
  %v171 = vld [vmem:[%s5] sm:$0xff]
  %v172 = vld [vmem:[%s5 + $0x8] sm:$0xff]
  %v173 = vadd.f32 %v165, %v171
  %v174 = vadd.f32 %v168, %v172
  %v175 = vsel %vm56, %v173, 0.0
  %176 = vadd.xlane.f32.xlu0 %v175
  %v177 = vpop.xlane.xlu0 %176
  %v178 = vsel %vm56, %v174, 0.0
  %179 = vadd.xlane.f32.xlu0 %v178
  %v180 = vpop.xlane.xlu0 %179
  %v181 = vrcp.pop 32.0
  %v182 = vmul.f32 %v177, %v181
  %v183 = vmul.f32 %v180, %v181
  %v184 = vsub.f32 %v173, %v182
  %v185 = vsub.f32 %v174, %v183
  %v186 = vmul.f32 %v184, %v184
  %v187 = vmul.f32 %v185, %v185
  %v188 = vsel %vm56, %v186, 0.0
  %189 = vadd.xlane.f32.xlu0 %v188
  %v190 = vpop.xlane.xlu0 %189
  %v191 = vsel %vm56, %v187, 0.0
  %192 = vadd.xlane.f32.xlu0 %v191
  %v193 = vpop.xlane.xlu0 %192
  %v194 = vmul.f32 %v190, %v181
  %v195 = vmul.f32 %v193, %v181
  %v196 = vadd.f32 %v194, 1e-05
  %v197 = vadd.f32 %v195, 1e-05
  %v198 = vrsqrt.pop %v196
  %v199 = vrsqrt.pop %v197
  %v200 = vmul.f32 %v184, %v198
  %v201 = vmul.f32 %v185, %v199
  %v202 = vld [vmem:[%s6] sm:$0x1]
  %v204 = vlaneseq
  %v205 = vshrl.u32 %v204, 7
  %v206 = vsub.s32 0, %v205
  %v207 = vrot.slane %v202, %v206
  %v209 = vmul.f32 %v200, %v207
  %v210 = vmul.f32 %v201, %v207
  %v211 = vld [vmem:[%s7] sm:$0x1]
  %v213 = vlaneseq
  %v214 = vshrl.u32 %v213, 7
  %v215 = vsub.s32 0, %v214
  %v216 = vrot.slane %v211, %v215
  %v218 = vadd.f32 %v209, %v216
  %v219 = vadd.f32 %v210, %v216
  %220 = vst.msk [vmem:[%s8] sm:$0xff] %vm56, %v218
  %221 = vst.msk [vmem:[%s8 + $0x8] sm:$0xff] %vm56, %v219
  // Predicated region
  $region34: #{transformer_forward.14} parent=0 // pred_check
    _
  $region35: #{transformer_forward.14} parent=0 // pred_check_branch
    %223 = sbr.rel (0) target = $region37
  $region36: #{transformer_forward.14} parent=0 // pred_region
    _
  $region37: #{transformer_forward.14} parent=0 // pred_fallthru
    _
  // Predicated region
  $region38: #{transformer_forward.14} parent=0 // pred_check
    _
  $region39: #{transformer_forward.14} parent=0 // pred_check_branch
    %225 = sbr.rel (0) target = $region41
  $region40: #{transformer_forward.14} parent=0 // pred_region
    _
  $region41: #{transformer_forward.14} parent=0 // pred_fallthru
    _

</llo_original>
